<compile_context>
chip_gen: v7x
topology: tpu7x:2x2x1
jax: 0.10.0
libtpu: 0.0.40
codegen_flags: <defaults>
</compile_context>

<pallas_src>
import functools

import jax
import jax.numpy as jnp
from jax.experimental import pallas as pl
from jax.experimental.pallas import tpu as pltpu


def _round_up(n, m):
    return ((n + m - 1) // m) * m


def _choose_tb(batch, tb):
    """Pick the batch-tile row count.

    Large (amortizes per-grid-step overhead), multiple of 16, and capped at
    ceil(B/2) so the 'parallel' grid keeps >= 2 steps for v7x's two TCs.
    """
    if tb is None:
        tb = 1024
    tb = max(16, min(tb, _round_up(batch, 16)))
    if batch >= 32:
        tb = min(tb, _round_up(-(-batch // 2), 16))
    return _round_up(tb, 16)


def mlp_kernel(x_ref, w1_ref, b1_ref, w2_ref, b2_ref, w3_ref, b3_ref, o_ref):
    # Linear 1 + ReLU (all f32; MXU accumulates in f32).
    h1 = jnp.dot(x_ref[...], w1_ref[...], preferred_element_type=jnp.float32)
    h1 = jnp.maximum(h1 + b1_ref[...], 0.0)
    # Linear 2 (end of `fc`) + ReLU (start of `out`).
    h2 = jnp.dot(h1, w2_ref[...], preferred_element_type=jnp.float32)
    h2 = jnp.maximum(h2 + b2_ref[...], 0.0)
    # Linear 3: final projection to the 12-wide output.
    o = jnp.dot(h2, w3_ref[...], preferred_element_type=jnp.float32) + b3_ref[...]
    o_ref[...] = o.astype(o_ref.dtype)


@functools.partial(jax.jit, static_argnames=("tb", "single_buffer_weights"))
def mlp_forward(x, w1, b1, w2, b2, w3, b3, *, tb=None, single_buffer_weights=True):
    B, d_in = x.shape
    d_out = w3.shape[1]

    tb = _choose_tb(B, tb)
    b_p = _round_up(B, tb)
    if b_p != B:                      # only pad the batch when it doesn't tile
        x = jnp.pad(x, ((0, b_p - B), (0, 0)))

    # Weights/biases never change across the grid: constant index maps keep them
    # VMEM-resident; Buffered(1) drops the pointless second buffer.
    def resident(arr):
        if single_buffer_weights:
            return pl.BlockSpec(arr.shape, lambda i: (0, 0),
                                pipeline_mode=pl.Buffered(1))
        return pl.BlockSpec(arr.shape, lambda i: (0, 0))

    out = pl.pallas_call(
        mlp_kernel,
        out_shape=jax.ShapeDtypeStruct((b_p, d_out), jnp.float32),
        grid=(b_p // tb,),
        in_specs=[
            pl.BlockSpec((tb, d_in), lambda i: (i, 0)),   # x: streamed per tile
            resident(w1), resident(b1),
            resident(w2), resident(b2),
            resident(w3), resident(b3),
        ],
        out_specs=pl.BlockSpec((tb, d_out), lambda i: (i, 0)),
        compiler_params=pltpu.CompilerParams(
            dimension_semantics=("parallel",)),  # v7x: shard batch over 2 TCs
    )(x, w1, b1, w2, b2, w3, b3)

    return out if b_p == B else out[:B]


def init_params(key, input_size, h_size):
    """Deterministic parameter init (torch-Linear-like uniform ranges)."""
    h_half = int(h_size * 0.5)
    out_dim = 12
    ks = jax.random.split(key, 6)

    def lin(kw, kb, fan_in, fan_out):
        bound = 1.0 / (fan_in ** 0.5)
        w = jax.random.uniform(kw, (fan_in, fan_out), jnp.float32, -bound, bound)
        b = jax.random.uniform(kb, (1, fan_out), jnp.float32, -bound, bound)
        return w, b

    w1, b1 = lin(ks[0], ks[1], input_size, h_size)
    w2, b2 = lin(ks[2], ks[3], h_size, h_half)
    w3, b3 = lin(ks[4], ks[5], h_half, out_dim)
    return w1, b1, w2, b2, w3, b3


if __name__ == "__main__":
    key = jax.random.PRNGKey(0)
    k_x, k_p = jax.random.split(key)

    batch = 512          # tb auto-selects 256 -> 2 "parallel" grid steps
    input_size = 32
    h_size = 32

    x = jax.random.normal(k_x, (batch, input_size), dtype=jnp.float32)
    params = init_params(k_p, input_size, h_size)

    try:
        out = jax.block_until_ready(mlp_forward(x, *params))
    except Exception:
        # Fallback if this jax build rejects pipeline_mode=pl.Buffered(1).
        out = jax.block_until_ready(
            mlp_forward(x, *params, single_buffer_weights=False))

    assert out.shape == (batch, 12), out.shape

    # f32 reference with the original module's semantics.
    w1, b1, w2, b2, w3, b3 = params
    f1 = jnp.maximum(x @ w1 + b1, 0.0)
    f2 = jnp.maximum(f1 @ w2 + b2, 0.0)
    ref = f2 @ w3 + b3
    max_err = float(jnp.max(jnp.abs(out - ref)))
    assert jnp.allclose(out, ref, atol=2e-2, rtol=2e-2), (
        "max |diff| vs f32 reference:", max_err)

    print("KERNEL_OK")
</pallas_src>

<mosaic_0001>
module attributes {stable_mosaic.version = 11 : i64} {
  func.func @mlp_kernel(%arg0: i32, %arg1: memref<256x32xf32, #tpu.memory_space<vmem>>, %arg2: memref<32x32xf32, #tpu.memory_space<vmem>>, %arg3: memref<1x32xf32, #tpu.memory_space<vmem>>, %arg4: memref<32x16xf32, #tpu.memory_space<vmem>>, %arg5: memref<1x16xf32, #tpu.memory_space<vmem>>, %arg6: memref<16x12xf32, #tpu.memory_space<vmem>>, %arg7: memref<1x12xf32, #tpu.memory_space<vmem>>, %arg8: memref<256x12xf32, #tpu.memory_space<vmem>>) attributes {dimension_semantics = [#tpu.dimension_semantics<parallel>], iteration_bounds = array<i64: 2>, scalar_prefetch = 0 : i64, scratch_operands = 0 : i64, tpu.core_type = #tpu.core_type<tc>, window_params = [{transform_indices = @transform_0, window_bounds = array<i64: 256, 32>}, {pipeline_mode = #tpu.pipeline_mode<synchronous>, transform_indices = @transform_1, window_bounds = array<i64: 32, 32>}, {pipeline_mode = #tpu.pipeline_mode<synchronous>, transform_indices = @transform_2, window_bounds = array<i64: 1, 32>}, {pipeline_mode = #tpu.pipeline_mode<synchronous>, transform_indices = @transform_3, window_bounds = array<i64: 32, 16>}, {pipeline_mode = #tpu.pipeline_mode<synchronous>, transform_indices = @transform_4, window_bounds = array<i64: 1, 16>}, {pipeline_mode = #tpu.pipeline_mode<synchronous>, transform_indices = @transform_5, window_bounds = array<i64: 16, 12>}, {pipeline_mode = #tpu.pipeline_mode<synchronous>, transform_indices = @transform_6, window_bounds = array<i64: 1, 12>}, {transform_indices = @transform_7, window_bounds = array<i64: 256, 12>}]} {
    %c0 = arith.constant 0 : index
    %c0_0 = arith.constant 0 : index
    %0 = vector.load %arg1[%c0, %c0_0] : memref<256x32xf32, #tpu.memory_space<vmem>>, vector<256x32xf32>
    %c0_1 = arith.constant 0 : index
    %c0_2 = arith.constant 0 : index
    %1 = vector.load %arg2[%c0_1, %c0_2] : memref<32x32xf32, #tpu.memory_space<vmem>>, vector<32x32xf32>
    %cst = arith.constant dense<0.000000e+00> : vector<256x32xf32>
    %2 = tpu.matmul %0, %1, %cst {dimension_numbers = #tpu.dot_dimension_numbers<[1], [0], [0], [1], [0, 0, 1, 1], [], []>} : vector<256x32xf32>, vector<32x32xf32>, vector<256x32xf32> -> vector<256x32xf32>
    %c0_3 = arith.constant 0 : index
    %c0_4 = arith.constant 0 : index
    %3 = vector.load %arg3[%c0_3, %c0_4] : memref<1x32xf32, #tpu.memory_space<vmem>>, vector<1x32xf32>
    %4 = vector.broadcast %3 : vector<1x32xf32> to vector<256x32xf32>
    %5 = arith.addf %2, %4 : vector<256x32xf32>
    %cst_5 = arith.constant 0.000000e+00 : f32
    %6 = vector.broadcast %cst_5 : f32 to vector<256x32xf32>
    %7 = arith.maximumf %5, %6 : vector<256x32xf32>
    %c0_6 = arith.constant 0 : index
    %c0_7 = arith.constant 0 : index
    %8 = vector.load %arg4[%c0_6, %c0_7] : memref<32x16xf32, #tpu.memory_space<vmem>>, vector<32x16xf32>
    %cst_8 = arith.constant dense<0.000000e+00> : vector<256x16xf32>
    %9 = tpu.matmul %7, %8, %cst_8 {dimension_numbers = #tpu.dot_dimension_numbers<[1], [0], [0], [1], [0, 0, 1, 1], [], []>} : vector<256x32xf32>, vector<32x16xf32>, vector<256x16xf32> -> vector<256x16xf32>
    %c0_9 = arith.constant 0 : index
    %c0_10 = arith.constant 0 : index
    %10 = vector.load %arg5[%c0_9, %c0_10] : memref<1x16xf32, #tpu.memory_space<vmem>>, vector<1x16xf32>
    %11 = vector.broadcast %10 : vector<1x16xf32> to vector<256x16xf32>
    %12 = arith.addf %9, %11 : vector<256x16xf32>
    %cst_11 = arith.constant 0.000000e+00 : f32
    %13 = vector.broadcast %cst_11 : f32 to vector<256x16xf32>
    %14 = arith.maximumf %12, %13 : vector<256x16xf32>
    %c0_12 = arith.constant 0 : index
    %c0_13 = arith.constant 0 : index
    %15 = vector.load %arg6[%c0_12, %c0_13] : memref<16x12xf32, #tpu.memory_space<vmem>>, vector<16x12xf32>
    %cst_14 = arith.constant dense<0.000000e+00> : vector<256x12xf32>
    %16 = tpu.matmul %14, %15, %cst_14 {dimension_numbers = #tpu.dot_dimension_numbers<[1], [0], [0], [1], [0, 0, 1, 1], [], []>} : vector<256x16xf32>, vector<16x12xf32>, vector<256x12xf32> -> vector<256x12xf32>
    %c0_15 = arith.constant 0 : index
    %c0_16 = arith.constant 0 : index
    %17 = vector.load %arg7[%c0_15, %c0_16] : memref<1x12xf32, #tpu.memory_space<vmem>>, vector<1x12xf32>
    %18 = vector.broadcast %17 : vector<1x12xf32> to vector<256x12xf32>
    %19 = arith.addf %16, %18 : vector<256x12xf32>
    %c0_17 = arith.constant 0 : index
    %c0_18 = arith.constant 0 : index
    %20 = vector.load %arg8[%c0_17, %c0_18] : memref<256x12xf32, #tpu.memory_space<vmem>>, vector<256x12xf32>
    tpu.vector_store %arg8[%c0_17, %c0_18], %19 {strides = array<i32>} : memref<256x12xf32, #tpu.memory_space<vmem>>, vector<256x12xf32>,
    return
  }
  func.func @transform_0(%arg0: i32) -> (i32, i32) {
    %c0_i32 = arith.constant 0 : i32
    %c0_i32_0 = arith.constant 0 : i32
    return %arg0, %c0_i32 : i32, i32
  }
  func.func @transform_1(%arg0: i32) -> (i32, i32) {
    %c0_i32 = arith.constant 0 : i32
    %c0_i32_0 = arith.constant 0 : i32
    %c0_i32_1 = arith.constant 0 : i32
    return %c0_i32, %c0_i32_0 : i32, i32
  }
  func.func @transform_2(%arg0: i32) -> (i32, i32) {
    %c0_i32 = arith.constant 0 : i32
    %c0_i32_0 = arith.constant 0 : i32
    %c0_i32_1 = arith.constant 0 : i32
    return %c0_i32, %c0_i32_0 : i32, i32
  }
  func.func @transform_3(%arg0: i32) -> (i32, i32) {
    %c0_i32 = arith.constant 0 : i32
    %c0_i32_0 = arith.constant 0 : i32
    %c0_i32_1 = arith.constant 0 : i32
    return %c0_i32, %c0_i32_0 : i32, i32
  }
  func.func @transform_4(%arg0: i32) -> (i32, i32) {
    %c0_i32 = arith.constant 0 : i32
    %c0_i32_0 = arith.constant 0 : i32
    %c0_i32_1 = arith.constant 0 : i32
    return %c0_i32, %c0_i32_0 : i32, i32
  }
  func.func @transform_5(%arg0: i32) -> (i32, i32) {
    %c0_i32 = arith.constant 0 : i32
    %c0_i32_0 = arith.constant 0 : i32
    %c0_i32_1 = arith.constant 0 : i32
    return %c0_i32, %c0_i32_0 : i32, i32
  }
  func.func @transform_6(%arg0: i32) -> (i32, i32) {
    %c0_i32 = arith.constant 0 : i32
    %c0_i32_0 = arith.constant 0 : i32
    %c0_i32_1 = arith.constant 0 : i32
    return %c0_i32, %c0_i32_0 : i32, i32
  }
  func.func @transform_7(%arg0: i32) -> (i32, i32) {
    %c0_i32 = arith.constant 0 : i32
    %c0_i32_0 = arith.constant 0 : i32
    return %arg0, %c0_i32 : i32, i32
  }
}

module attributes {stable_mosaic.version = 11 : i64} {
  func.func @mlp_kernel(%arg0: i32, %arg1: memref<256x32xf32, #tpu.memory_space<vmem>>, %arg2: memref<32x32xf32, #tpu.memory_space<vmem>>, %arg3: memref<1x32xf32, #tpu.memory_space<vmem>>, %arg4: memref<32x16xf32, #tpu.memory_space<vmem>>, %arg5: memref<1x16xf32, #tpu.memory_space<vmem>>, %arg6: memref<16x12xf32, #tpu.memory_space<vmem>>, %arg7: memref<1x12xf32, #tpu.memory_space<vmem>>, %arg8: memref<256x12xf32, #tpu.memory_space<vmem>>) attributes {dimension_semantics = [#tpu.dimension_semantics<parallel>], iteration_bounds = array<i64: 2>, scalar_prefetch = 0 : i64, scratch_operands = 0 : i64, tpu.core_type = #tpu.core_type<tc>, window_params = [{transform_indices = @transform_0, window_bounds = array<i64: 256, 32>}, {pipeline_mode = #tpu.pipeline_mode<synchronous>, transform_indices = @transform_1, window_bounds = array<i64: 32, 32>}, {pipeline_mode = #tpu.pipeline_mode<synchronous>, transform_indices = @transform_2, window_bounds = array<i64: 1, 32>}, {pipeline_mode = #tpu.pipeline_mode<synchronous>, transform_indices = @transform_3, window_bounds = array<i64: 32, 16>}, {pipeline_mode = #tpu.pipeline_mode<synchronous>, transform_indices = @transform_4, window_bounds = array<i64: 1, 16>}, {pipeline_mode = #tpu.pipeline_mode<synchronous>, transform_indices = @transform_5, window_bounds = array<i64: 16, 12>}, {pipeline_mode = #tpu.pipeline_mode<synchronous>, transform_indices = @transform_6, window_bounds = array<i64: 1, 12>}, {transform_indices = @transform_7, window_bounds = array<i64: 256, 12>}]} {
    %c0 = arith.constant 0 : index
    %c0_0 = arith.constant 0 : index
    %0 = vector.load %arg1[%c0, %c0_0] : memref<256x32xf32, #tpu.memory_space<vmem>>, vector<256x32xf32>
    %c0_1 = arith.constant 0 : index
    %c0_2 = arith.constant 0 : index
    %1 = vector.load %arg2[%c0_1, %c0_2] : memref<32x32xf32, #tpu.memory_space<vmem>>, vector<32x32xf32>
    %cst = arith.constant dense<0.000000e+00> : vector<256x32xf32>
    %2 = tpu.matmul %0, %1, %cst {dimension_numbers = #tpu.dot_dimension_numbers<[1], [0], [0], [1], [0, 0, 1, 1], [], []>} : vector<256x32xf32>, vector<32x32xf32>, vector<256x32xf32> -> vector<256x32xf32>
    %c0_3 = arith.constant 0 : index
    %c0_4 = arith.constant 0 : index
    %3 = vector.load %arg3[%c0_3, %c0_4] : memref<1x32xf32, #tpu.memory_space<vmem>>, vector<1x32xf32>
    %4 = vector.broadcast %3 : vector<1x32xf32> to vector<256x32xf32>
    %5 = arith.addf %2, %4 : vector<256x32xf32>
    %cst_5 = arith.constant 0.000000e+00 : f32
    %6 = vector.broadcast %cst_5 : f32 to vector<256x32xf32>
    %7 = arith.maximumf %5, %6 : vector<256x32xf32>
    %c0_6 = arith.constant 0 : index
    %c0_7 = arith.constant 0 : index
    %8 = vector.load %arg4[%c0_6, %c0_7] : memref<32x16xf32, #tpu.memory_space<vmem>>, vector<32x16xf32>
    %cst_8 = arith.constant dense<0.000000e+00> : vector<256x16xf32>
    %9 = tpu.matmul %7, %8, %cst_8 {dimension_numbers = #tpu.dot_dimension_numbers<[1], [0], [0], [1], [0, 0, 1, 1], [], []>} : vector<256x32xf32>, vector<32x16xf32>, vector<256x16xf32> -> vector<256x16xf32>
    %c0_9 = arith.constant 0 : index
    %c0_10 = arith.constant 0 : index
    %10 = vector.load %arg5[%c0_9, %c0_10] : memref<1x16xf32, #tpu.memory_space<vmem>>, vector<1x16xf32>
    %11 = vector.broadcast %10 : vector<1x16xf32> to vector<256x16xf32>
    %12 = arith.addf %9, %11 : vector<256x16xf32>
    %cst_11 = arith.constant 0.000000e+00 : f32
    %13 = vector.broadcast %cst_11 : f32 to vector<256x16xf32>
    %14 = arith.maximumf %12, %13 : vector<256x16xf32>
    %c0_12 = arith.constant 0 : index
    %c0_13 = arith.constant 0 : index
    %15 = vector.load %arg6[%c0_12, %c0_13] : memref<16x12xf32, #tpu.memory_space<vmem>>, vector<16x12xf32>
    %cst_14 = arith.constant dense<0.000000e+00> : vector<256x12xf32>
    %16 = tpu.matmul %14, %15, %cst_14 {dimension_numbers = #tpu.dot_dimension_numbers<[1], [0], [0], [1], [0, 0, 1, 1], [], []>} : vector<256x16xf32>, vector<16x12xf32>, vector<256x12xf32> -> vector<256x12xf32>
    %c0_15 = arith.constant 0 : index
    %c0_16 = arith.constant 0 : index
    %17 = vector.load %arg7[%c0_15, %c0_16] : memref<1x12xf32, #tpu.memory_space<vmem>>, vector<1x12xf32>
    %18 = vector.broadcast %17 : vector<1x12xf32> to vector<256x12xf32>
    %19 = arith.addf %16, %18 : vector<256x12xf32>
    %c0_17 = arith.constant 0 : index
    %c0_18 = arith.constant 0 : index
    %20 = vector.load %arg8[%c0_17, %c0_18] : memref<256x12xf32, #tpu.memory_space<vmem>>, vector<256x12xf32>
    tpu.vector_store %arg8[%c0_17, %c0_18], %19 {strides = array<i32>} : memref<256x12xf32, #tpu.memory_space<vmem>>, vector<256x12xf32>,
    return
  }
  func.func @transform_0(%arg0: i32) -> (i32, i32) {
    %c0_i32 = arith.constant 0 : i32
    %c0_i32_0 = arith.constant 0 : i32
    return %arg0, %c0_i32 : i32, i32
  }
  func.func @transform_1(%arg0: i32) -> (i32, i32) {
    %c0_i32 = arith.constant 0 : i32
    %c0_i32_0 = arith.constant 0 : i32
    %c0_i32_1 = arith.constant 0 : i32
    return %c0_i32, %c0_i32_0 : i32, i32
  }
  func.func @transform_2(%arg0: i32) -> (i32, i32) {
    %c0_i32 = arith.constant 0 : i32
    %c0_i32_0 = arith.constant 0 : i32
    %c0_i32_1 = arith.constant 0 : i32
    return %c0_i32, %c0_i32_0 : i32, i32
  }
  func.func @transform_3(%arg0: i32) -> (i32, i32) {
    %c0_i32 = arith.constant 0 : i32
    %c0_i32_0 = arith.constant 0 : i32
    %c0_i32_1 = arith.constant 0 : i32
    return %c0_i32, %c0_i32_0 : i32, i32
  }
  func.func @transform_4(%arg0: i32) -> (i32, i32) {
    %c0_i32 = arith.constant 0 : i32
    %c0_i32_0 = arith.constant 0 : i32
    %c0_i32_1 = arith.constant 0 : i32
    return %c0_i32, %c0_i32_0 : i32, i32
  }
  func.func @transform_5(%arg0: i32) -> (i32, i32) {
    %c0_i32 = arith.constant 0 : i32
    %c0_i32_0 = arith.constant 0 : i32
    %c0_i32_1 = arith.constant 0 : i32
    return %c0_i32, %c0_i32_0 : i32, i32
  }
  func.func @transform_6(%arg0: i32) -> (i32, i32) {
    %c0_i32 = arith.constant 0 : i32
    %c0_i32_0 = arith.constant 0 : i32
    %c0_i32_1 = arith.constant 0 : i32
    return %c0_i32, %c0_i32_0 : i32, i32
  }
  func.func @transform_7(%arg0: i32) -> (i32, i32) {
    %c0_i32 = arith.constant 0 : i32
    %c0_i32_0 = arith.constant 0 : i32
    return %arg0, %c0_i32 : i32, i32
  }
}

</mosaic_0001>

<llo_original>
// kernel: mlp_forward.1
$region0: #{mlp_forward.1}
  #allocation0 [shape = 'u32[]', space=smem, size = 0x4, offset = 0x4, fixed_abs, tag = 'smem constant byte address 0x4 - core index']
  #allocation1 [shape = 'u32[144,128]{1,0:T(1,128)}', space=vmem, size = 0x12000, scoped, tag = 'internal scratch']
  %s0 = inlined_call_operand.vmem [shape: f32[512,32], index: 0, kind: input, shape index: {}]
  %s1 = inlined_call_operand.vmem [shape: f32[32,32], index: 1, kind: input, shape index: {}]
  %s2 = inlined_call_operand.vmem [shape: f32[1,32], index: 2, kind: input, shape index: {}]
  %s3 = inlined_call_operand.vmem [shape: f32[32,16], index: 3, kind: input, shape index: {}]
  %s4 = inlined_call_operand.vmem [shape: f32[1,16], index: 4, kind: input, shape index: {}]
  %s5 = inlined_call_operand.vmem [shape: f32[16,12], index: 5, kind: input, shape index: {}]
  %s6 = inlined_call_operand.vmem [shape: f32[1,12], index: 6, kind: input, shape index: {}]
  %s7 = inlined_call_operand.vmem [shape: f32[512,12], index: 7, kind: output, shape index: {}]
  %s8 = sld [smem:[#allocation0]]
  $region61: #{mlp_forward.1} parent=0
    _
  %s10 = ssub.s32 1, %s8
  %s11 = scalar_select 0, %s10, %s8
  loop: start=0, step=1, limit=4
  $region2: #{mlp_forward.1} parent=0 // loop_pre_header
    _
  $region3: #{mlp_forward.1} parent=0 // loop_header
    %s13 = sphi 0, %s17
    %p14 = scmp.ge.s32.totalorder %s13, 4
    %s23 = sphi 0, %s25
    %s26 = sphi 0, %s23
    %s27 = sphi 0, %s26
    %s43 = sphi 0, %s27
    %s47 = sphi 0, %s47
    %s49 = sphi 0, %s47
    %s50 = sphi 0, %s49
    %s64 = sphi 0, %s50
    %s68 = sphi 0, %s68
    %s70 = sphi 0, %s68
    %s71 = sphi 0, %s70
    %s85 = sphi 0, %s71
    %s89 = sphi 0, %s89
    %s91 = sphi 0, %s89
    %s92 = sphi 0, %s91
    %s106 = sphi 0, %s92
    %s110 = sphi 0, %s110
    %s112 = sphi 0, %s110
    %s113 = sphi 0, %s112
    %s127 = sphi 0, %s113
    %s131 = sphi 0, %s131
    %s133 = sphi 0, %s131
    %s134 = sphi 0, %s133
    %s148 = sphi 0, %s134
    %s152 = sphi 0, %s152
    %s154 = sphi 0, %s152
    %s155 = sphi 0, %s154
    %s169 = sphi 0, %s155
    %s175 = sphi 0, %s177
    %s178 = sphi 0, %s175
    %s179 = sphi 0, %s178
    %s195 = sphi 0, %s179
  $region4: #{mlp_forward.1} parent=0 // loop_header_branch
    %16 = sbr.rel (%p14) target = $region8
  $region5: #{mlp_forward.1} parent=0 // loop_body
    %s18 = ssub.s32 %s13, 1
    %s19 = ssub.s32 %s13, 2
    %s20 = sadd.s32 %s13, 1
    %s21 = ssub.s32 %s13, %s20
    %p22 = scmp.eq.s32.totalorder %s21, 0
    %s24 = sadd.s32 %s23, 1
    %s25 = scalar_select %p22, %s23, %s24
    %p28 = pneg %p22
    %p29 = scmp.eq.s32.totalorder %s13, 1
    %p30 = por %p28, %p29
    %p31 = scmp.ne.s32.totalorder %s23, %s26
    %p32 = scmp.eq.s32.totalorder %s13, 0
    %p33 = por %p31, %p32
    %p34 = scmp.ne.s32.totalorder %s23, %s26
    %p35 = scmp.eq.s32.totalorder %s18, 1
    %p36 = por %p34, %p35
    %p37 = scmp.ne.s32.totalorder %s26, %s27
    %p38 = scmp.eq.s32.totalorder %s18, 0
    %p39 = por %p37, %p38
    %p40 = scmp.ne.s32.totalorder %s26, %s27
    %p41 = scmp.eq.s32.totalorder %s19, 1
    %p42 = por %p40, %p41
    %p44 = scmp.ne.s32.totalorder %s27, %s43
    %p45 = scmp.eq.s32.totalorder %s19, 0
    %p46 = por %p44, %p45
    %s48 = sadd.s32 %s47, 1
    %p51 = scmp.eq.s32.totalorder %s13, 1
    %p52 = scmp.ne.s32.totalorder %s47, %s49
    %p53 = scmp.eq.s32.totalorder %s13, 0
    %p54 = por %p52, %p53
    %p55 = scmp.ne.s32.totalorder %s47, %s49
    %p56 = scmp.eq.s32.totalorder %s18, 1
    %p57 = por %p55, %p56
    %p58 = scmp.ne.s32.totalorder %s49, %s50
    %p59 = scmp.eq.s32.totalorder %s18, 0
    %p60 = por %p58, %p59
    %p61 = scmp.ne.s32.totalorder %s49, %s50
    %p62 = scmp.eq.s32.totalorder %s19, 1
    %p63 = por %p61, %p62
    %p65 = scmp.ne.s32.totalorder %s50, %s64
    %p66 = scmp.eq.s32.totalorder %s19, 0
    %p67 = por %p65, %p66
    %s69 = sadd.s32 %s68, 1
    %p72 = scmp.eq.s32.totalorder %s13, 1
    %p73 = scmp.ne.s32.totalorder %s68, %s70
    %p74 = scmp.eq.s32.totalorder %s13, 0
    %p75 = por %p73, %p74
    %p76 = scmp.ne.s32.totalorder %s68, %s70
    %p77 = scmp.eq.s32.totalorder %s18, 1
    %p78 = por %p76, %p77
    %p79 = scmp.ne.s32.totalorder %s70, %s71
    %p80 = scmp.eq.s32.totalorder %s18, 0
    %p81 = por %p79, %p80
    %p82 = scmp.ne.s32.totalorder %s70, %s71
    %p83 = scmp.eq.s32.totalorder %s19, 1
    %p84 = por %p82, %p83
    %p86 = scmp.ne.s32.totalorder %s71, %s85
    %p87 = scmp.eq.s32.totalorder %s19, 0
    %p88 = por %p86, %p87
    %s90 = sadd.s32 %s89, 1
    %p93 = scmp.eq.s32.totalorder %s13, 1
    %p94 = scmp.ne.s32.totalorder %s89, %s91
    %p95 = scmp.eq.s32.totalorder %s13, 0
    %p96 = por %p94, %p95
    %p97 = scmp.ne.s32.totalorder %s89, %s91
    %p98 = scmp.eq.s32.totalorder %s18, 1
    %p99 = por %p97, %p98
    %p100 = scmp.ne.s32.totalorder %s91, %s92
    %p101 = scmp.eq.s32.totalorder %s18, 0
    %p102 = por %p100, %p101
    %p103 = scmp.ne.s32.totalorder %s91, %s92
    %p104 = scmp.eq.s32.totalorder %s19, 1
    %p105 = por %p103, %p104
    %p107 = scmp.ne.s32.totalorder %s92, %s106
    %p108 = scmp.eq.s32.totalorder %s19, 0
    %p109 = por %p107, %p108
    %s111 = sadd.s32 %s110, 1
    %p114 = scmp.eq.s32.totalorder %s13, 1
    %p115 = scmp.ne.s32.totalorder %s110, %s112
    %p116 = scmp.eq.s32.totalorder %s13, 0
    %p117 = por %p115, %p116
    %p118 = scmp.ne.s32.totalorder %s110, %s112
    %p119 = scmp.eq.s32.totalorder %s18, 1
    %p120 = por %p118, %p119
    %p121 = scmp.ne.s32.totalorder %s112, %s113
    %p122 = scmp.eq.s32.totalorder %s18, 0
    %p123 = por %p121, %p122
    %p124 = scmp.ne.s32.totalorder %s112, %s113
    %p125 = scmp.eq.s32.totalorder %s19, 1
    %p126 = por %p124, %p125
    %p128 = scmp.ne.s32.totalorder %s113, %s127
    %p129 = scmp.eq.s32.totalorder %s19, 0
    %p130 = por %p128, %p129
    %s132 = sadd.s32 %s131, 1
    %p135 = scmp.eq.s32.totalorder %s13, 1
    %p136 = scmp.ne.s32.totalorder %s131, %s133
    %p137 = scmp.eq.s32.totalorder %s13, 0
    %p138 = por %p136, %p137
    %p139 = scmp.ne.s32.totalorder %s131, %s133
    %p140 = scmp.eq.s32.totalorder %s18, 1
    %p141 = por %p139, %p140
    %p142 = scmp.ne.s32.totalorder %s133, %s134
    %p143 = scmp.eq.s32.totalorder %s18, 0
    %p144 = por %p142, %p143
    %p145 = scmp.ne.s32.totalorder %s133, %s134
    %p146 = scmp.eq.s32.totalorder %s19, 1
    %p147 = por %p145, %p146
    %p149 = scmp.ne.s32.totalorder %s134, %s148
    %p150 = scmp.eq.s32.totalorder %s19, 0
    %p151 = por %p149, %p150
    %s153 = sadd.s32 %s152, 1
    %p156 = scmp.eq.s32.totalorder %s13, 1
    %p157 = scmp.ne.s32.totalorder %s152, %s154
    %p158 = scmp.eq.s32.totalorder %s13, 0
    %p159 = por %p157, %p158
    %p160 = scmp.ne.s32.totalorder %s152, %s154
    %p161 = scmp.eq.s32.totalorder %s18, 1
    %p162 = por %p160, %p161
    %p163 = scmp.ne.s32.totalorder %s154, %s155
    %p164 = scmp.eq.s32.totalorder %s18, 0
    %p165 = por %p163, %p164
    %p166 = scmp.ne.s32.totalorder %s154, %s155
    %p167 = scmp.eq.s32.totalorder %s19, 1
    %p168 = por %p166, %p167
    %p170 = scmp.ne.s32.totalorder %s155, %s169
    %p171 = scmp.eq.s32.totalorder %s19, 0
    %p172 = por %p170, %p171
    %s173 = ssub.s32 %s13, %s20
    %p174 = scmp.eq.s32.totalorder %s173, 0
    %s176 = sadd.s32 %s175, 1
    %s177 = scalar_select %p174, %s175, %s176
    %p180 = pneg %p174
    %p181 = scmp.eq.s32.totalorder %s13, 1
    %p182 = por %p180, %p181
    %p183 = scmp.ne.s32.totalorder %s175, %s178
    %p184 = scmp.eq.s32.totalorder %s13, 0
    %p185 = por %p183, %p184
    %p186 = scmp.ne.s32.totalorder %s175, %s178
    %p187 = scmp.eq.s32.totalorder %s18, 1
    %p188 = por %p186, %p187
    %p189 = scmp.ne.s32.totalorder %s178, %s179
    %p190 = scmp.eq.s32.totalorder %s18, 0
    %p191 = por %p189, %p190
    %p192 = scmp.ne.s32.totalorder %s178, %s179
    %p193 = scmp.eq.s32.totalorder %s19, 1
    %p194 = por %p192, %p193
    %p196 = scmp.ne.s32.totalorder %s179, %s195
    %p197 = scmp.eq.s32.totalorder %s19, 0
    %p198 = por %p196, %p197
    %p199 = scmp.le.s32.totalorder 1, %s13
    %p200 = scmp.lt.s32.totalorder %s13, 3
    %p201 = pnand %p199, %p200
    %p202 = pneg %p201
    // Predicated region
    $region9: #{mlp_forward.1} parent=5 // pred_check
      _
    $region10: #{mlp_forward.1} parent=5 // pred_check_branch
      %204 = sbr.rel (%p201) target = $region12
    $region11: #{mlp_forward.1} parent=5 // pred_region
      %s205 = ssub.s32 %s13, 1
      // Predicated region
      $region13: #{mlp_forward.1} parent=11 // pred_check
        %p206 = pneg %p60
      $region14: #{mlp_forward.1} parent=11 // pred_check_branch
        %208 = sbr.rel (%p206) target = $region16
      $region15: #{mlp_forward.1} parent=11 // pred_region
        _
      $region16: #{mlp_forward.1} parent=11 // pred_fallthru
        _
      // Predicated region
      $region17: #{mlp_forward.1} parent=11 // pred_check
        %p209 = pneg %p81
      $region18: #{mlp_forward.1} parent=11 // pred_check_branch
        %211 = sbr.rel (%p209) target = $region20
      $region19: #{mlp_forward.1} parent=11 // pred_region
        _
      $region20: #{mlp_forward.1} parent=11 // pred_fallthru
        _
      // Predicated region
      $region21: #{mlp_forward.1} parent=11 // pred_check
        %p212 = pneg %p102
      $region22: #{mlp_forward.1} parent=11 // pred_check_branch
        %214 = sbr.rel (%p212) target = $region24
      $region23: #{mlp_forward.1} parent=11 // pred_region
        _
      $region24: #{mlp_forward.1} parent=11 // pred_fallthru
        _
      // Predicated region
      $region25: #{mlp_forward.1} parent=11 // pred_check
        %p215 = pneg %p123
      $region26: #{mlp_forward.1} parent=11 // pred_check_branch
        %217 = sbr.rel (%p215) target = $region28
      $region27: #{mlp_forward.1} parent=11 // pred_region
        _
      $region28: #{mlp_forward.1} parent=11 // pred_fallthru
        _
      // Predicated region
      $region29: #{mlp_forward.1} parent=11 // pred_check
        %p218 = pneg %p144
      $region30: #{mlp_forward.1} parent=11 // pred_check_branch
        %220 = sbr.rel (%p218) target = $region32
      $region31: #{mlp_forward.1} parent=11 // pred_region
        _
      $region32: #{mlp_forward.1} parent=11 // pred_fallthru
        _
      // Predicated region
      $region33: #{mlp_forward.1} parent=11 // pred_check
        %p221 = pneg %p165
      $region34: #{mlp_forward.1} parent=11 // pred_check_branch
        %223 = sbr.rel (%p221) target = $region36
      $region35: #{mlp_forward.1} parent=11 // pred_region
        _
      $region36: #{mlp_forward.1} parent=11 // pred_fallthru
        _
    $region12: #{mlp_forward.1} parent=5 // pred_fallthru
      _
    %p224 = scmp.lt.s32.totalorder %s13, 2
    // Predicated region
    $region37: #{mlp_forward.1} parent=5 // pred_check
      %p225 = pneg %p224
    $region38: #{mlp_forward.1} parent=5 // pred_check_branch
      %227 = sbr.rel (%p225) target = $region40
    $region39: #{mlp_forward.1} parent=5 // pred_region
      // Predicated region
      $region41: #{mlp_forward.1} parent=39 // pred_check
        %p228 = pneg %p33
      $region42: #{mlp_forward.1} parent=39 // pred_check_branch
        %230 = sbr.rel (%p228) target = $region44
      $region43: #{mlp_forward.1} parent=39 // pred_region
        %s231 = smul.u32 32, %s13
        %p232 = scmp.lt.s32.totalorder %s231, 63
        %s233 = scalar_select %p232, %s231, 63
        %s234 = smul.addr %s233, 8
        %s235 = scalar_lea.vmem %s0, %s234
        %s236 = smul.u32 32, %s13
      $region44: #{mlp_forward.1} parent=39 // pred_fallthru
        _
    $region40: #{mlp_forward.1} parent=5 // pred_fallthru
      _
    %p237 = scmp.le.s32.totalorder 1, %s13
    %p238 = scmp.lt.s32.totalorder %s13, 3
    %p239 = pnand %p237, %p238
    %p240 = pneg %p239
    // Predicated region
    $region45: #{mlp_forward.1} parent=5 // pred_check
      _
    $region46: #{mlp_forward.1} parent=5 // pred_check_branch
      %242 = sbr.rel (%p239) target = $region48
    $region47: #{mlp_forward.1} parent=5 // pred_region
      %s243 = ssub.s32 %s13, 1
      %s244 = smul.u32 32, %s18
      %p245 = scmp.lt.s32.totalorder %s244, 63
      %s246 = scalar_select %p245, %s244, 63
      %s247 = smul.addr %s246, 8
      %s248 = scalar_lea.vmem %s0, %s247
      %p249 = pneg %p39
      %p250 = pneg %p36
      %p251 = pneg %p60
      %p252 = pneg %p57
      %p253 = pneg %p81
      %p254 = pneg %p78
      %p255 = pneg %p102
      %p256 = pneg %p99
      %p257 = pneg %p123
      %p258 = pneg %p120
      %p259 = pneg %p144
      %p260 = pneg %p141
      %p261 = pneg %p165
      %p262 = pneg %p162
      %p263 = pneg %p191
      %p264 = pneg %p188
      %s265 = smul.u32 32, %s18
      %p266 = scmp.lt.s32.totalorder %s265, 63
      %s267 = scalar_select %p266, %s265, 63
      %s268 = smul.addr %s267, 8
      %s269 = scalar_lea.vmem %s7, %s268
      %s270 = smul.u32 32, %s18
      %p271 = scmp.lt.s32.totalorder %s270, 63
      %s272 = scalar_select %p271, %s270, 63
      %s273 = smul.addr %s272, 8
      %s274 = scalar_lea.vmem %s0, %s273
      %s275 = smul.u32 32, %s18
      %s276 = smul.u32 32, %s18
      %p277 = scmp.lt.s32.totalorder %s276, 63
      %s278 = scalar_select %p277, %s276, 63
      %s279 = smul.addr %s278, 8
      %s280 = scalar_lea.vmem %s7, %s279
      %s281 = smul.u32 32, %s18
      %v282 = vld [vmem:[%s274] sm:$0xff]
      %v283 = vld [vmem:[%s274 + $0x8] sm:$0xff]
      %v284 = vld [vmem:[%s274 + $0x10] sm:$0xff]
      %v285 = vld [vmem:[%s274 + $0x18] sm:$0xff]
      %v286 = vld [vmem:[%s274 + $0x20] sm:$0xff]
      %v287 = vld [vmem:[%s274 + $0x28] sm:$0xff]
      %v288 = vld [vmem:[%s274 + $0x30] sm:$0xff]
      %v289 = vld [vmem:[%s274 + $0x38] sm:$0xff]
      %v290 = vld [vmem:[%s274 + $0x40] sm:$0xff]
      %v291 = vld [vmem:[%s274 + $0x48] sm:$0xff]
      %v292 = vld [vmem:[%s274 + $0x50] sm:$0xff]
      %v293 = vld [vmem:[%s274 + $0x58] sm:$0xff]
      %v294 = vld [vmem:[%s274 + $0x60] sm:$0xff]
      %v295 = vld [vmem:[%s274 + $0x68] sm:$0xff]
      %v296 = vld [vmem:[%s274 + $0x70] sm:$0xff]
      %v297 = vld [vmem:[%s274 + $0x78] sm:$0xff]
      %v298 = vld [vmem:[%s274 + $0x80] sm:$0xff]
      %v299 = vld [vmem:[%s274 + $0x88] sm:$0xff]
      %v300 = vld [vmem:[%s274 + $0x90] sm:$0xff]
      %v301 = vld [vmem:[%s274 + $0x98] sm:$0xff]
      %v302 = vld [vmem:[%s274 + $0xa0] sm:$0xff]
      %v303 = vld [vmem:[%s274 + $0xa8] sm:$0xff]
      %v304 = vld [vmem:[%s274 + $0xb0] sm:$0xff]
      %v305 = vld [vmem:[%s274 + $0xb8] sm:$0xff]
      %v306 = vld [vmem:[%s274 + $0xc0] sm:$0xff]
      %v307 = vld [vmem:[%s274 + $0xc8] sm:$0xff]
      %v308 = vld [vmem:[%s274 + $0xd0] sm:$0xff]
      %v309 = vld [vmem:[%s274 + $0xd8] sm:$0xff]
      %v310 = vld [vmem:[%s274 + $0xe0] sm:$0xff]
      %v311 = vld [vmem:[%s274 + $0xe8] sm:$0xff]
      %v312 = vld [vmem:[%s274 + $0xf0] sm:$0xff]
      %v313 = vld [vmem:[%s274 + $0xf8] sm:$0xff]
      %v314 = vld [vmem:[%s1] sm:$0xff]
      %v315 = vld [vmem:[%s1 + $0x8] sm:$0xff]
      %v316 = vld [vmem:[%s1 + $0x10] sm:$0xff]
      %v317 = vld [vmem:[%s1 + $0x18] sm:$0xff]
      %v318 = vld [vmem:[%s2] sm:$0x1]
      %v320 = vlaneseq
      %v321 = vshrl.u32 %v320, 7
      %v322 = vsub.s32 0, %v321
      %v323 = vrot.slane %v318, %v322
      %vm325 = vcmask 261120
      %v327 = vsel %vm325, %v282, 0
      %v330 = vsel %vm325, %v283, 0
      %v333 = vsel %vm325, %v284, 0
      %v336 = vsel %vm325, %v285, 0
      %v339 = vsel %vm325, %v286, 0
      %v342 = vsel %vm325, %v287, 0
      %v345 = vsel %vm325, %v288, 0
      %v348 = vsel %vm325, %v289, 0
      %v351 = vsel %vm325, %v290, 0
      %v354 = vsel %vm325, %v291, 0
      %v357 = vsel %vm325, %v292, 0
      %v360 = vsel %vm325, %v293, 0
      %v363 = vsel %vm325, %v294, 0
      %v366 = vsel %vm325, %v295, 0
      %v369 = vsel %vm325, %v296, 0
      %v372 = vsel %vm325, %v297, 0
      %v375 = vsel %vm325, %v298, 0
      %v378 = vsel %vm325, %v299, 0
      %v381 = vsel %vm325, %v300, 0
      %v384 = vsel %vm325, %v301, 0
      %v387 = vsel %vm325, %v302, 0
      %v390 = vsel %vm325, %v303, 0
      %v393 = vsel %vm325, %v304, 0
      %v396 = vsel %vm325, %v305, 0
      %v399 = vsel %vm325, %v306, 0
      %v402 = vsel %vm325, %v307, 0
      %v405 = vsel %vm325, %v308, 0
      %v408 = vsel %vm325, %v309, 0
      %v411 = vsel %vm325, %v310, 0
      %v414 = vsel %vm325, %v311, 0
      %v417 = vsel %vm325, %v312, 0
      %v420 = vsel %vm325, %v313, 0
      %422 = vmatprep.subr.mxu0 0.0
      %423 = vmatpush1.msra.mxu0 %v314
      %424 = vmatprep.subr.mxu0 0.0
      %425 = vmatpush1.msra.mxu0 %v315
      %426 = vmatprep.subr.mxu0 0.0
      %427 = vmatpush1.msra.mxu0 %v316
      %428 = vmatprep.subr.mxu0 0.0
      %429 = vmatpush1.msra.mxu0 %v317
      %430 = vmatprep.subr.mxu0 0.0
      %431 = vmatpush1.msra.mxu0 0.0
      %432 = vmatprep.subr.mxu0 0.0
      %433 = vmatpush1.msra.mxu0 0.0
      %434 = vmatprep.subr.mxu0 0.0
      %435 = vmatpush1.msra.mxu0 0.0
      %436 = vmatprep.subr.mxu0 0.0
      %437 = vmatpush1.msra.mxu0 0.0
      %438 = vmatprep.subr.mxu0 0.0
      %439 = vmatpush1.msra.mxu0 0.0
      %440 = vmatprep.subr.mxu0 0.0
      %441 = vmatpush1.msra.mxu0 0.0
      %442 = vmatprep.subr.mxu0 0.0
      %443 = vmatpush1.msra.mxu0 0.0
      %444 = vmatprep.subr.mxu0 0.0
      %445 = vmatpush1.msra.mxu0 0.0
      %446 = vmatprep.subr.mxu0 0.0
      %447 = vmatpush1.msra.mxu0 0.0
      %448 = vmatprep.subr.mxu0 0.0
      %449 = vmatpush1.msra.mxu0 0.0
      %450 = vmatprep.subr.mxu0 0.0
      %451 = vmatpush1.msra.mxu0 0.0
      %452 = vmatprep.subr.mxu0 0.0
      %453 = vmatpush1.msra.mxu0 0.0
      %454 = vmatprep.subr.mxu0 0.0
      %455 = vmatpush1.msra.mxu0 0.0
      %456 = vmatprep.subr.mxu0 0.0
      %457 = vmatpush1.msra.mxu0 0.0
      %458 = vmatprep.subr.mxu0 0.0
      %459 = vmatpush1.msra.mxu0 0.0
      %460 = vmatprep.subr.mxu0 0.0
      %461 = vmatpush1.msra.mxu0 0.0
      %462 = vmatprep.subr.mxu0 0.0
      %463 = vmatpush1.msra.mxu0 0.0
      %464 = vmatprep.subr.mxu0 0.0
      %465 = vmatpush1.msra.mxu0 0.0
      %466 = vmatprep.subr.mxu0 0.0
      %467 = vmatpush1.msra.mxu0 0.0
      %468 = vmatprep.subr.mxu0 0.0
      %469 = vmatpush1.msra.mxu0 0.0
      %470 = vmatprep.subr.mxu0 0.0
      %471 = vmatpush1.msra.mxu0 0.0
      %472 = vmatprep.subr.mxu0 0.0
      %473 = vmatpush1.msra.mxu0 0.0
      %474 = vmatprep.subr.mxu0 0.0
      %475 = vmatpush1.msra.mxu0 0.0
      %476 = vmatprep.subr.mxu0 0.0
      %477 = vmatpush1.msra.mxu0 0.0
      %478 = vmatprep.subr.mxu0 0.0
      %479 = vmatpush1.msra.mxu0 0.0
      %480 = vmatprep.subr.mxu0 0.0
      %481 = vmatpush1.msra.mxu0 0.0
      %482 = vmatprep.subr.mxu0 0.0
      %483 = vmatpush1.msra.mxu0 0.0
      %484 = vmatprep.subr.mxu0 0.0
      %485 = vmatpush1.msra.mxu0 0.0
      %486 = vmatprep.mubr.f32.mxu0 0.0
      %487 = vmatmul.mubr.f32.gmra.mrb[0].mxu0 %v327
      %v488 = vpop.f32.mrb[0].mxu0
      %v489 = vadd.f32 %v323, %v488
      %v490 = vpop.f32.mrb[0].mxu0
      %491 = vmatprep.mubr.f32.mxu0 0.0
      %492 = vmatmul.mubr.f32.gmra.mrb[0].mxu0 %v330
      %v493 = vpop.f32.mrb[0].mxu0
      %v494 = vadd.f32 %v323, %v493
      %v495 = vpop.f32.mrb[0].mxu0
      %496 = vmatprep.mubr.f32.mxu0 0.0
      %497 = vmatmul.mubr.f32.gmra.mrb[0].mxu0 %v333
      %v498 = vpop.f32.mrb[0].mxu0
      %v499 = vadd.f32 %v323, %v498
      %v500 = vpop.f32.mrb[0].mxu0
      %501 = vmatprep.mubr.f32.mxu0 0.0
      %502 = vmatmul.mubr.f32.gmra.mrb[0].mxu0 %v336
      %v503 = vpop.f32.mrb[0].mxu0
      %v504 = vadd.f32 %v323, %v503
      %v505 = vpop.f32.mrb[0].mxu0
      %506 = vmatprep.mubr.f32.mxu0 0.0
      %507 = vmatmul.mubr.f32.gmra.mrb[0].mxu0 %v339
      %v508 = vpop.f32.mrb[0].mxu0
      %v509 = vadd.f32 %v323, %v508
      %v510 = vpop.f32.mrb[0].mxu0
      %511 = vmatprep.mubr.f32.mxu0 0.0
      %512 = vmatmul.mubr.f32.gmra.mrb[0].mxu0 %v342
      %v513 = vpop.f32.mrb[0].mxu0
      %v514 = vadd.f32 %v323, %v513
      %v515 = vpop.f32.mrb[0].mxu0
      %516 = vmatprep.mubr.f32.mxu0 0.0
      %517 = vmatmul.mubr.f32.gmra.mrb[0].mxu0 %v345
      %v518 = vpop.f32.mrb[0].mxu0
      %v519 = vadd.f32 %v323, %v518
      %v520 = vpop.f32.mrb[0].mxu0
      %521 = vmatprep.mubr.f32.mxu0 0.0
      %522 = vmatmul.mubr.f32.gmra.mrb[0].mxu0 %v348
      %v523 = vpop.f32.mrb[0].mxu0
      %v524 = vadd.f32 %v323, %v523
      %v525 = vpop.f32.mrb[0].mxu0
      %526 = vmatprep.mubr.f32.mxu0 0.0
      %527 = vmatmul.mubr.f32.gmra.mrb[0].mxu0 %v351
      %v528 = vpop.f32.mrb[0].mxu0
      %v529 = vadd.f32 %v323, %v528
      %v530 = vpop.f32.mrb[0].mxu0
      %531 = vmatprep.mubr.f32.mxu0 0.0
      %532 = vmatmul.mubr.f32.gmra.mrb[0].mxu0 %v354
      %v533 = vpop.f32.mrb[0].mxu0
      %v534 = vadd.f32 %v323, %v533
      %v535 = vpop.f32.mrb[0].mxu0
      %536 = vmatprep.mubr.f32.mxu0 0.0
      %537 = vmatmul.mubr.f32.gmra.mrb[0].mxu0 %v357
      %v538 = vpop.f32.mrb[0].mxu0
      %v539 = vadd.f32 %v323, %v538
      %v540 = vpop.f32.mrb[0].mxu0
      %541 = vmatprep.mubr.f32.mxu0 0.0
      %542 = vmatmul.mubr.f32.gmra.mrb[0].mxu0 %v360
      %v543 = vpop.f32.mrb[0].mxu0
      %v544 = vadd.f32 %v323, %v543
      %v545 = vpop.f32.mrb[0].mxu0
      %546 = vmatprep.mubr.f32.mxu0 0.0
      %547 = vmatmul.mubr.f32.gmra.mrb[0].mxu0 %v363
      %v548 = vpop.f32.mrb[0].mxu0
      %v549 = vadd.f32 %v323, %v548
      %v550 = vpop.f32.mrb[0].mxu0
      %551 = vmatprep.mubr.f32.mxu0 0.0
      %552 = vmatmul.mubr.f32.gmra.mrb[0].mxu0 %v366
      %v553 = vpop.f32.mrb[0].mxu0
      %v554 = vadd.f32 %v323, %v553
      %v555 = vpop.f32.mrb[0].mxu0
      %556 = vmatprep.mubr.f32.mxu0 0.0
      %557 = vmatmul.mubr.f32.gmra.mrb[0].mxu0 %v369
      %v558 = vpop.f32.mrb[0].mxu0
      %v559 = vadd.f32 %v323, %v558
      %v560 = vpop.f32.mrb[0].mxu0
      %561 = vmatprep.mubr.f32.mxu0 0.0
      %562 = vmatmul.mubr.f32.gmra.mrb[0].mxu0 %v372
      %v563 = vpop.f32.mrb[0].mxu0
      %v564 = vadd.f32 %v323, %v563
      %v565 = vpop.f32.mrb[0].mxu0
      %566 = vmatprep.mubr.f32.mxu0 0.0
      %567 = vmatmul.mubr.f32.gmra.mrb[0].mxu0 %v375
      %v568 = vpop.f32.mrb[0].mxu0
      %v569 = vadd.f32 %v323, %v568
      %v570 = vpop.f32.mrb[0].mxu0
      %571 = vmatprep.mubr.f32.mxu0 0.0
      %572 = vmatmul.mubr.f32.gmra.mrb[0].mxu0 %v378
      %v573 = vpop.f32.mrb[0].mxu0
      %v574 = vadd.f32 %v323, %v573
      %v575 = vpop.f32.mrb[0].mxu0
      %576 = vmatprep.mubr.f32.mxu0 0.0
      %577 = vmatmul.mubr.f32.gmra.mrb[0].mxu0 %v381
      %v578 = vpop.f32.mrb[0].mxu0
      %v579 = vadd.f32 %v323, %v578
      %v580 = vpop.f32.mrb[0].mxu0
      %581 = vmatprep.mubr.f32.mxu0 0.0
      %582 = vmatmul.mubr.f32.gmra.mrb[0].mxu0 %v384
      %v583 = vpop.f32.mrb[0].mxu0
      %v584 = vadd.f32 %v323, %v583
      %v585 = vpop.f32.mrb[0].mxu0
      %586 = vmatprep.mubr.f32.mxu0 0.0
      %587 = vmatmul.mubr.f32.gmra.mrb[0].mxu0 %v387
      %v588 = vpop.f32.mrb[0].mxu0
      %v589 = vadd.f32 %v323, %v588
      %v590 = vpop.f32.mrb[0].mxu0
      %591 = vmatprep.mubr.f32.mxu0 0.0
      %592 = vmatmul.mubr.f32.gmra.mrb[0].mxu0 %v390
      %v593 = vpop.f32.mrb[0].mxu0
      %v594 = vadd.f32 %v323, %v593
      %v595 = vpop.f32.mrb[0].mxu0
      %596 = vmatprep.mubr.f32.mxu0 0.0
      %597 = vmatmul.mubr.f32.gmra.mrb[0].mxu0 %v393
      %v598 = vpop.f32.mrb[0].mxu0
      %v599 = vadd.f32 %v323, %v598
      %v600 = vpop.f32.mrb[0].mxu0
      %601 = vmatprep.mubr.f32.mxu0 0.0
      %602 = vmatmul.mubr.f32.gmra.mrb[0].mxu0 %v396
      %v603 = vpop.f32.mrb[0].mxu0
      %v604 = vadd.f32 %v323, %v603
      %v605 = vpop.f32.mrb[0].mxu0
      %606 = vmatprep.mubr.f32.mxu0 0.0
      %607 = vmatmul.mubr.f32.gmra.mrb[0].mxu0 %v399
      %v608 = vpop.f32.mrb[0].mxu0
      %v609 = vadd.f32 %v323, %v608
      %v610 = vpop.f32.mrb[0].mxu0
      %611 = vmatprep.mubr.f32.mxu0 0.0
      %612 = vmatmul.mubr.f32.gmra.mrb[0].mxu0 %v402
      %v613 = vpop.f32.mrb[0].mxu0
      %v614 = vadd.f32 %v323, %v613
      %v615 = vpop.f32.mrb[0].mxu0
      %616 = vmatprep.mubr.f32.mxu0 0.0
      %617 = vmatmul.mubr.f32.gmra.mrb[0].mxu0 %v405
      %v618 = vpop.f32.mrb[0].mxu0
      %v619 = vadd.f32 %v323, %v618
      %v620 = vpop.f32.mrb[0].mxu0
      %621 = vmatprep.mubr.f32.mxu0 0.0
      %622 = vmatmul.mubr.f32.gmra.mrb[0].mxu0 %v408
      %v623 = vpop.f32.mrb[0].mxu0
      %v624 = vadd.f32 %v323, %v623
      %v625 = vpop.f32.mrb[0].mxu0
      %626 = vmatprep.mubr.f32.mxu0 0.0
      %627 = vmatmul.mubr.f32.gmra.mrb[0].mxu0 %v411
      %v628 = vpop.f32.mrb[0].mxu0
      %v629 = vadd.f32 %v323, %v628
      %v630 = vpop.f32.mrb[0].mxu0
      %631 = vmatprep.mubr.f32.mxu0 0.0
      %632 = vmatmul.mubr.f32.gmra.mrb[0].mxu0 %v414
      %v633 = vpop.f32.mrb[0].mxu0
      %v634 = vadd.f32 %v323, %v633
      %v635 = vpop.f32.mrb[0].mxu0
      %636 = vmatprep.mubr.f32.mxu0 0.0
      %637 = vmatmul.mubr.f32.gmra.mrb[0].mxu0 %v417
      %v638 = vpop.f32.mrb[0].mxu0
      %v639 = vadd.f32 %v323, %v638
      %v640 = vpop.f32.mrb[0].mxu0
      %641 = vmatprep.mubr.f32.mxu0 0.0
      %642 = vmatmul.mubr.f32.gmra.mrb[0].mxu0 %v420
      %v643 = vpop.f32.mrb[0].mxu0
      %v644 = vadd.f32 %v323, %v643
      %v645 = vpop.f32.mrb[0].mxu0
      %646 = vdwg.mxu0
      %v647 = vmax.f32 %v489, 0.0
      %v648 = vmax.f32 %v494, 0.0
      %v649 = vmax.f32 %v499, 0.0
      %v650 = vmax.f32 %v504, 0.0
      %v651 = vmax.f32 %v509, 0.0
      %v652 = vmax.f32 %v514, 0.0
      %v653 = vmax.f32 %v519, 0.0
      %v654 = vmax.f32 %v524, 0.0
      %v655 = vmax.f32 %v529, 0.0
      %v656 = vmax.f32 %v534, 0.0
      %v657 = vmax.f32 %v539, 0.0
      %v658 = vmax.f32 %v544, 0.0
      %v659 = vmax.f32 %v549, 0.0
      %v660 = vmax.f32 %v554, 0.0
      %v661 = vmax.f32 %v559, 0.0
      %v662 = vmax.f32 %v564, 0.0
      %v663 = vmax.f32 %v569, 0.0
      %v664 = vmax.f32 %v574, 0.0
      %v665 = vmax.f32 %v579, 0.0
      %v666 = vmax.f32 %v584, 0.0
      %v667 = vmax.f32 %v589, 0.0
      %v668 = vmax.f32 %v594, 0.0
      %v669 = vmax.f32 %v599, 0.0
      %v670 = vmax.f32 %v604, 0.0
      %v671 = vmax.f32 %v609, 0.0
      %v672 = vmax.f32 %v614, 0.0
      %v673 = vmax.f32 %v619, 0.0
      %v674 = vmax.f32 %v624, 0.0
      %v675 = vmax.f32 %v629, 0.0
      %v676 = vmax.f32 %v634, 0.0
      %v677 = vmax.f32 %v639, 0.0
      %v678 = vmax.f32 %v644, 0.0
      %v679 = vld [vmem:[%s3] sm:$0xff]
      %v680 = vld [vmem:[%s3 + $0x8] sm:$0xff]
      %v681 = vld [vmem:[%s3 + $0x10] sm:$0xff]
      %v682 = vld [vmem:[%s3 + $0x18] sm:$0xff]
      %v683 = vld [vmem:[%s4] sm:$0x1]
      %v685 = vlaneseq
      %v686 = vshrl.u32 %v685, 7
      %v687 = vsub.s32 0, %v686
      %v688 = vrot.slane %v683, %v687
      %v691 = vsel %vm325, %v647, 0
      %v694 = vsel %vm325, %v648, 0
      %v697 = vsel %vm325, %v649, 0
      %v700 = vsel %vm325, %v650, 0
      %v703 = vsel %vm325, %v651, 0
      %v706 = vsel %vm325, %v652, 0
      %v709 = vsel %vm325, %v653, 0
      %v712 = vsel %vm325, %v654, 0
      %v715 = vsel %vm325, %v655, 0
      %v718 = vsel %vm325, %v656, 0
      %v721 = vsel %vm325, %v657, 0
      %v724 = vsel %vm325, %v658, 0
      %v727 = vsel %vm325, %v659, 0
      %v730 = vsel %vm325, %v660, 0
      %v733 = vsel %vm325, %v661, 0
      %v736 = vsel %vm325, %v662, 0
      %v739 = vsel %vm325, %v663, 0
      %v742 = vsel %vm325, %v664, 0
      %v745 = vsel %vm325, %v665, 0
      %v748 = vsel %vm325, %v666, 0
      %v751 = vsel %vm325, %v667, 0
      %v754 = vsel %vm325, %v668, 0
      %v757 = vsel %vm325, %v669, 0
      %v760 = vsel %vm325, %v670, 0
      %v763 = vsel %vm325, %v671, 0
      %v766 = vsel %vm325, %v672, 0
      %v769 = vsel %vm325, %v673, 0
      %v772 = vsel %vm325, %v674, 0
      %v775 = vsel %vm325, %v675, 0
      %v778 = vsel %vm325, %v676, 0
      %v781 = vsel %vm325, %v677, 0
      %v784 = vsel %vm325, %v678, 0
      %786 = vmatprep.subr.mxu0 0.0
      %787 = vmatpush1.msra.mxu0 %v679
      %788 = vmatprep.subr.mxu0 0.0
      %789 = vmatpush1.msra.mxu0 %v680
      %790 = vmatprep.subr.mxu0 0.0
      %791 = vmatpush1.msra.mxu0 %v681
      %792 = vmatprep.subr.mxu0 0.0
      %793 = vmatpush1.msra.mxu0 %v682
      %794 = vmatprep.subr.mxu0 0.0
      %795 = vmatpush1.msra.mxu0 0.0
      %796 = vmatprep.subr.mxu0 0.0
      %797 = vmatpush1.msra.mxu0 0.0
      %798 = vmatprep.subr.mxu0 0.0
      %799 = vmatpush1.msra.mxu0 0.0
      %800 = vmatprep.subr.mxu0 0.0
      %801 = vmatpush1.msra.mxu0 0.0
      %802 = vmatprep.subr.mxu0 0.0
      %803 = vmatpush1.msra.mxu0 0.0
      %804 = vmatprep.subr.mxu0 0.0
      %805 = vmatpush1.msra.mxu0 0.0
      %806 = vmatprep.subr.mxu0 0.0
      %807 = vmatpush1.msra.mxu0 0.0
      %808 = vmatprep.subr.mxu0 0.0
      %809 = vmatpush1.msra.mxu0 0.0
      %810 = vmatprep.subr.mxu0 0.0
      %811 = vmatpush1.msra.mxu0 0.0
      %812 = vmatprep.subr.mxu0 0.0
      %813 = vmatpush1.msra.mxu0 0.0
      %814 = vmatprep.subr.mxu0 0.0
      %815 = vmatpush1.msra.mxu0 0.0
      %816 = vmatprep.subr.mxu0 0.0
      %817 = vmatpush1.msra.mxu0 0.0
      %818 = vmatprep.subr.mxu0 0.0
      %819 = vmatpush1.msra.mxu0 0.0
      %820 = vmatprep.subr.mxu0 0.0
      %821 = vmatpush1.msra.mxu0 0.0
      %822 = vmatprep.subr.mxu0 0.0
      %823 = vmatpush1.msra.mxu0 0.0
      %824 = vmatprep.subr.mxu0 0.0
      %825 = vmatpush1.msra.mxu0 0.0
      %826 = vmatprep.subr.mxu0 0.0
      %827 = vmatpush1.msra.mxu0 0.0
      %828 = vmatprep.subr.mxu0 0.0
      %829 = vmatpush1.msra.mxu0 0.0
      %830 = vmatprep.subr.mxu0 0.0
      %831 = vmatpush1.msra.mxu0 0.0
      %832 = vmatprep.subr.mxu0 0.0
      %833 = vmatpush1.msra.mxu0 0.0
      %834 = vmatprep.subr.mxu0 0.0
      %835 = vmatpush1.msra.mxu0 0.0
      %836 = vmatprep.subr.mxu0 0.0
      %837 = vmatpush1.msra.mxu0 0.0
      %838 = vmatprep.subr.mxu0 0.0
      %839 = vmatpush1.msra.mxu0 0.0
      %840 = vmatprep.subr.mxu0 0.0
      %841 = vmatpush1.msra.mxu0 0.0
      %842 = vmatprep.subr.mxu0 0.0
      %843 = vmatpush1.msra.mxu0 0.0
      %844 = vmatprep.subr.mxu0 0.0
      %845 = vmatpush1.msra.mxu0 0.0
      %846 = vmatprep.subr.mxu0 0.0
      %847 = vmatpush1.msra.mxu0 0.0
      %848 = vmatprep.subr.mxu0 0.0
      %849 = vmatpush1.msra.mxu0 0.0
      %850 = vmatprep.mubr.f32.mxu0 0.0
      %851 = vmatmul.mubr.f32.gmra.mrb[0].mxu0 %v691
      %v852 = vpop.f32.mrb[0].mxu0
      %v853 = vadd.f32 %v688, %v852
      %v854 = vpop.f32.mrb[0].mxu0
      %855 = vmatprep.mubr.f32.mxu0 0.0
      %856 = vmatmul.mubr.f32.gmra.mrb[0].mxu0 %v694
      %v857 = vpop.f32.mrb[0].mxu0
      %v858 = vadd.f32 %v688, %v857
      %v859 = vpop.f32.mrb[0].mxu0
      %860 = vmatprep.mubr.f32.mxu0 0.0
      %861 = vmatmul.mubr.f32.gmra.mrb[0].mxu0 %v697
      %v862 = vpop.f32.mrb[0].mxu0
      %v863 = vadd.f32 %v688, %v862
      %v864 = vpop.f32.mrb[0].mxu0
      %865 = vmatprep.mubr.f32.mxu0 0.0
      %866 = vmatmul.mubr.f32.gmra.mrb[0].mxu0 %v700
      %v867 = vpop.f32.mrb[0].mxu0
      %v868 = vadd.f32 %v688, %v867
      %v869 = vpop.f32.mrb[0].mxu0
      %870 = vmatprep.mubr.f32.mxu0 0.0
      %871 = vmatmul.mubr.f32.gmra.mrb[0].mxu0 %v703
      %v872 = vpop.f32.mrb[0].mxu0
      %v873 = vadd.f32 %v688, %v872
      %v874 = vpop.f32.mrb[0].mxu0
      %875 = vmatprep.mubr.f32.mxu0 0.0
      %876 = vmatmul.mubr.f32.gmra.mrb[0].mxu0 %v706
      %v877 = vpop.f32.mrb[0].mxu0
      %v878 = vadd.f32 %v688, %v877
      %v879 = vpop.f32.mrb[0].mxu0
      %880 = vmatprep.mubr.f32.mxu0 0.0
      %881 = vmatmul.mubr.f32.gmra.mrb[0].mxu0 %v709
      %v882 = vpop.f32.mrb[0].mxu0
      %v883 = vadd.f32 %v688, %v882
      %v884 = vpop.f32.mrb[0].mxu0
      %885 = vmatprep.mubr.f32.mxu0 0.0
      %886 = vmatmul.mubr.f32.gmra.mrb[0].mxu0 %v712
      %v887 = vpop.f32.mrb[0].mxu0
      %v888 = vadd.f32 %v688, %v887
      %v889 = vpop.f32.mrb[0].mxu0
      %890 = vmatprep.mubr.f32.mxu0 0.0
      %891 = vmatmul.mubr.f32.gmra.mrb[0].mxu0 %v715
      %v892 = vpop.f32.mrb[0].mxu0
      %v893 = vadd.f32 %v688, %v892
      %v894 = vpop.f32.mrb[0].mxu0
      %895 = vmatprep.mubr.f32.mxu0 0.0
      %896 = vmatmul.mubr.f32.gmra.mrb[0].mxu0 %v718
      %v897 = vpop.f32.mrb[0].mxu0
      %v898 = vadd.f32 %v688, %v897
      %v899 = vpop.f32.mrb[0].mxu0
      %900 = vmatprep.mubr.f32.mxu0 0.0
      %901 = vmatmul.mubr.f32.gmra.mrb[0].mxu0 %v721
      %v902 = vpop.f32.mrb[0].mxu0
      %v903 = vadd.f32 %v688, %v902
      %v904 = vpop.f32.mrb[0].mxu0
      %905 = vmatprep.mubr.f32.mxu0 0.0
      %906 = vmatmul.mubr.f32.gmra.mrb[0].mxu0 %v724
      %v907 = vpop.f32.mrb[0].mxu0
      %v908 = vadd.f32 %v688, %v907
      %v909 = vpop.f32.mrb[0].mxu0
      %910 = vmatprep.mubr.f32.mxu0 0.0
      %911 = vmatmul.mubr.f32.gmra.mrb[0].mxu0 %v727
      %v912 = vpop.f32.mrb[0].mxu0
      %v913 = vadd.f32 %v688, %v912
      %v914 = vpop.f32.mrb[0].mxu0
      %915 = vmatprep.mubr.f32.mxu0 0.0
      %916 = vmatmul.mubr.f32.gmra.mrb[0].mxu0 %v730
      %v917 = vpop.f32.mrb[0].mxu0
      %v918 = vadd.f32 %v688, %v917
      %v919 = vpop.f32.mrb[0].mxu0
      %920 = vmatprep.mubr.f32.mxu0 0.0
      %921 = vmatmul.mubr.f32.gmra.mrb[0].mxu0 %v733
      %v922 = vpop.f32.mrb[0].mxu0
      %v923 = vadd.f32 %v688, %v922
      %v924 = vpop.f32.mrb[0].mxu0
      %925 = vmatprep.mubr.f32.mxu0 0.0
      %926 = vmatmul.mubr.f32.gmra.mrb[0].mxu0 %v736
      %v927 = vpop.f32.mrb[0].mxu0
      %v928 = vadd.f32 %v688, %v927
      %v929 = vpop.f32.mrb[0].mxu0
      %930 = vmatprep.mubr.f32.mxu0 0.0
      %931 = vmatmul.mubr.f32.gmra.mrb[0].mxu0 %v739
      %v932 = vpop.f32.mrb[0].mxu0
      %v933 = vadd.f32 %v688, %v932
      %v934 = vpop.f32.mrb[0].mxu0
      %935 = vmatprep.mubr.f32.mxu0 0.0
      %936 = vmatmul.mubr.f32.gmra.mrb[0].mxu0 %v742
      %v937 = vpop.f32.mrb[0].mxu0
      %v938 = vadd.f32 %v688, %v937
      %v939 = vpop.f32.mrb[0].mxu0
      %940 = vmatprep.mubr.f32.mxu0 0.0
      %941 = vmatmul.mubr.f32.gmra.mrb[0].mxu0 %v745
      %v942 = vpop.f32.mrb[0].mxu0
      %v943 = vadd.f32 %v688, %v942
      %v944 = vpop.f32.mrb[0].mxu0
      %945 = vmatprep.mubr.f32.mxu0 0.0
      %946 = vmatmul.mubr.f32.gmra.mrb[0].mxu0 %v748
      %v947 = vpop.f32.mrb[0].mxu0
      %v948 = vadd.f32 %v688, %v947
      %v949 = vpop.f32.mrb[0].mxu0
      %950 = vmatprep.mubr.f32.mxu0 0.0
      %951 = vmatmul.mubr.f32.gmra.mrb[0].mxu0 %v751
      %v952 = vpop.f32.mrb[0].mxu0
      %v953 = vadd.f32 %v688, %v952
      %v954 = vpop.f32.mrb[0].mxu0
      %955 = vmatprep.mubr.f32.mxu0 0.0
      %956 = vmatmul.mubr.f32.gmra.mrb[0].mxu0 %v754
      %v957 = vpop.f32.mrb[0].mxu0
      %v958 = vadd.f32 %v688, %v957
      %v959 = vpop.f32.mrb[0].mxu0
      %960 = vmatprep.mubr.f32.mxu0 0.0
      %961 = vmatmul.mubr.f32.gmra.mrb[0].mxu0 %v757
      %v962 = vpop.f32.mrb[0].mxu0
      %v963 = vadd.f32 %v688, %v962
      %v964 = vpop.f32.mrb[0].mxu0
      %965 = vmatprep.mubr.f32.mxu0 0.0
      %966 = vmatmul.mubr.f32.gmra.mrb[0].mxu0 %v760
      %v967 = vpop.f32.mrb[0].mxu0
      %v968 = vadd.f32 %v688, %v967
      %v969 = vpop.f32.mrb[0].mxu0
      %970 = vmatprep.mubr.f32.mxu0 0.0
      %971 = vmatmul.mubr.f32.gmra.mrb[0].mxu0 %v763
      %v972 = vpop.f32.mrb[0].mxu0
      %v973 = vadd.f32 %v688, %v972
      %v974 = vpop.f32.mrb[0].mxu0
      %975 = vmatprep.mubr.f32.mxu0 0.0
      %976 = vmatmul.mubr.f32.gmra.mrb[0].mxu0 %v766
      %v977 = vpop.f32.mrb[0].mxu0
      %v978 = vadd.f32 %v688, %v977
      %v979 = vpop.f32.mrb[0].mxu0
      %980 = vmatprep.mubr.f32.mxu0 0.0
      %981 = vmatmul.mubr.f32.gmra.mrb[0].mxu0 %v769
      %v982 = vpop.f32.mrb[0].mxu0
      %v983 = vadd.f32 %v688, %v982
      %v984 = vpop.f32.mrb[0].mxu0
      %985 = vmatprep.mubr.f32.mxu0 0.0
      %986 = vmatmul.mubr.f32.gmra.mrb[0].mxu0 %v772
      %v987 = vpop.f32.mrb[0].mxu0
      %v988 = vadd.f32 %v688, %v987
      %v989 = vpop.f32.mrb[0].mxu0
      %990 = vmatprep.mubr.f32.mxu0 0.0
      %991 = vmatmul.mubr.f32.gmra.mrb[0].mxu0 %v775
      %v992 = vpop.f32.mrb[0].mxu0
      %v993 = vadd.f32 %v688, %v992
      %v994 = vpop.f32.mrb[0].mxu0
      %995 = vmatprep.mubr.f32.mxu0 0.0
      %996 = vmatmul.mubr.f32.gmra.mrb[0].mxu0 %v778
      %v997 = vpop.f32.mrb[0].mxu0
      %v998 = vadd.f32 %v688, %v997
      %v999 = vpop.f32.mrb[0].mxu0
      %1000 = vmatprep.mubr.f32.mxu0 0.0
      %1001 = vmatmul.mubr.f32.gmra.mrb[0].mxu0 %v781
      %v1002 = vpop.f32.mrb[0].mxu0
      %v1003 = vadd.f32 %v688, %v1002
      %v1004 = vpop.f32.mrb[0].mxu0
      %1005 = vmatprep.mubr.f32.mxu0 0.0
      %1006 = vmatmul.mubr.f32.gmra.mrb[0].mxu0 %v784
      %v1007 = vpop.f32.mrb[0].mxu0
      %v1008 = vadd.f32 %v688, %v1007
      %v1009 = vpop.f32.mrb[0].mxu0
      %1010 = vdwg.mxu0
      %v1011 = vmax.f32 %v853, 0.0
      %v1012 = vmax.f32 %v858, 0.0
      %v1013 = vmax.f32 %v863, 0.0
      %v1014 = vmax.f32 %v868, 0.0
      %v1015 = vmax.f32 %v873, 0.0
      %v1016 = vmax.f32 %v878, 0.0
      %v1017 = vmax.f32 %v883, 0.0
      %v1018 = vmax.f32 %v888, 0.0
      %v1019 = vmax.f32 %v893, 0.0
      %v1020 = vmax.f32 %v898, 0.0
      %v1021 = vmax.f32 %v903, 0.0
      %v1022 = vmax.f32 %v908, 0.0
      %v1023 = vmax.f32 %v913, 0.0
      %v1024 = vmax.f32 %v918, 0.0
      %v1025 = vmax.f32 %v923, 0.0
      %v1026 = vmax.f32 %v928, 0.0
      %v1027 = vmax.f32 %v933, 0.0
      %v1028 = vmax.f32 %v938, 0.0
      %v1029 = vmax.f32 %v943, 0.0
      %v1030 = vmax.f32 %v948, 0.0
      %v1031 = vmax.f32 %v953, 0.0
      %v1032 = vmax.f32 %v958, 0.0
      %v1033 = vmax.f32 %v963, 0.0
      %v1034 = vmax.f32 %v968, 0.0
      %v1035 = vmax.f32 %v973, 0.0
      %v1036 = vmax.f32 %v978, 0.0
      %v1037 = vmax.f32 %v983, 0.0
      %v1038 = vmax.f32 %v988, 0.0
      %v1039 = vmax.f32 %v993, 0.0
      %v1040 = vmax.f32 %v998, 0.0
      %v1041 = vmax.f32 %v1003, 0.0
      %v1042 = vmax.f32 %v1008, 0.0
      %v1043 = vld [vmem:[%s5] sm:$0xff]
      %v1044 = vld [vmem:[%s5 + $0x8] sm:$0xff]
      %v1045 = vld [vmem:[%s6] sm:$0x1]
      %v1047 = vlaneseq
      %v1048 = vshrl.u32 %v1047, 7
      %v1049 = vsub.s32 0, %v1048
      %v1050 = vrot.slane %v1045, %v1049
      %vm1052 = vcmask 130048
      %v1054 = vsel %vm1052, %v1011, 0
      %v1057 = vsel %vm1052, %v1012, 0
      %v1060 = vsel %vm1052, %v1013, 0
      %v1063 = vsel %vm1052, %v1014, 0
      %v1066 = vsel %vm1052, %v1015, 0
      %v1069 = vsel %vm1052, %v1016, 0
      %v1072 = vsel %vm1052, %v1017, 0
      %v1075 = vsel %vm1052, %v1018, 0
      %v1078 = vsel %vm1052, %v1019, 0
      %v1081 = vsel %vm1052, %v1020, 0
      %v1084 = vsel %vm1052, %v1021, 0
      %v1087 = vsel %vm1052, %v1022, 0
      %v1090 = vsel %vm1052, %v1023, 0
      %v1093 = vsel %vm1052, %v1024, 0
      %v1096 = vsel %vm1052, %v1025, 0
      %v1099 = vsel %vm1052, %v1026, 0
      %v1102 = vsel %vm1052, %v1027, 0
      %v1105 = vsel %vm1052, %v1028, 0
      %v1108 = vsel %vm1052, %v1029, 0
      %v1111 = vsel %vm1052, %v1030, 0
      %v1114 = vsel %vm1052, %v1031, 0
      %v1117 = vsel %vm1052, %v1032, 0
      %v1120 = vsel %vm1052, %v1033, 0
      %v1123 = vsel %vm1052, %v1034, 0
      %v1126 = vsel %vm1052, %v1035, 0
      %v1129 = vsel %vm1052, %v1036, 0
      %v1132 = vsel %vm1052, %v1037, 0
      %v1135 = vsel %vm1052, %v1038, 0
      %v1138 = vsel %vm1052, %v1039, 0
      %v1141 = vsel %vm1052, %v1040, 0
      %v1144 = vsel %vm1052, %v1041, 0
      %v1147 = vsel %vm1052, %v1042, 0
      %1149 = vmatprep.subr.mxu0 0.0
      %1150 = vmatpush1.msra.mxu0 %v1043
      %1151 = vmatprep.subr.mxu0 0.0
      %1152 = vmatpush1.msra.mxu0 %v1044
      %1153 = vmatprep.subr.mxu0 0.0
      %1154 = vmatpush1.msra.mxu0 0.0
      %1155 = vmatprep.subr.mxu0 0.0
      %1156 = vmatpush1.msra.mxu0 0.0
      %1157 = vmatprep.subr.mxu0 0.0
      %1158 = vmatpush1.msra.mxu0 0.0
      %1159 = vmatprep.subr.mxu0 0.0
      %1160 = vmatpush1.msra.mxu0 0.0
      %1161 = vmatprep.subr.mxu0 0.0
      %1162 = vmatpush1.msra.mxu0 0.0
      %1163 = vmatprep.subr.mxu0 0.0
      %1164 = vmatpush1.msra.mxu0 0.0
      %1165 = vmatprep.subr.mxu0 0.0
      %1166 = vmatpush1.msra.mxu0 0.0
      %1167 = vmatprep.subr.mxu0 0.0
      %1168 = vmatpush1.msra.mxu0 0.0
      %1169 = vmatprep.subr.mxu0 0.0
      %1170 = vmatpush1.msra.mxu0 0.0
      %1171 = vmatprep.subr.mxu0 0.0
      %1172 = vmatpush1.msra.mxu0 0.0
      %1173 = vmatprep.subr.mxu0 0.0
      %1174 = vmatpush1.msra.mxu0 0.0
      %1175 = vmatprep.subr.mxu0 0.0
      %1176 = vmatpush1.msra.mxu0 0.0
      %1177 = vmatprep.subr.mxu0 0.0
      %1178 = vmatpush1.msra.mxu0 0.0
      %1179 = vmatprep.subr.mxu0 0.0
      %1180 = vmatpush1.msra.mxu0 0.0
      %1181 = vmatprep.subr.mxu0 0.0
      %1182 = vmatpush1.msra.mxu0 0.0
      %1183 = vmatprep.subr.mxu0 0.0
      %1184 = vmatpush1.msra.mxu0 0.0
      %1185 = vmatprep.subr.mxu0 0.0
      %1186 = vmatpush1.msra.mxu0 0.0
      %1187 = vmatprep.subr.mxu0 0.0
      %1188 = vmatpush1.msra.mxu0 0.0
      %1189 = vmatprep.subr.mxu0 0.0
      %1190 = vmatpush1.msra.mxu0 0.0
      %1191 = vmatprep.subr.mxu0 0.0
      %1192 = vmatpush1.msra.mxu0 0.0
      %1193 = vmatprep.subr.mxu0 0.0
      %1194 = vmatpush1.msra.mxu0 0.0
      %1195 = vmatprep.subr.mxu0 0.0
      %1196 = vmatpush1.msra.mxu0 0.0
      %1197 = vmatprep.subr.mxu0 0.0
      %1198 = vmatpush1.msra.mxu0 0.0
      %1199 = vmatprep.subr.mxu0 0.0
      %1200 = vmatpush1.msra.mxu0 0.0
      %1201 = vmatprep.subr.mxu0 0.0
      %1202 = vmatpush1.msra.mxu0 0.0
      %1203 = vmatprep.subr.mxu0 0.0
      %1204 = vmatpush1.msra.mxu0 0.0
      %1205 = vmatprep.subr.mxu0 0.0
      %1206 = vmatpush1.msra.mxu0 0.0
      %1207 = vmatprep.subr.mxu0 0.0
      %1208 = vmatpush1.msra.mxu0 0.0
      %1209 = vmatprep.subr.mxu0 0.0
      %1210 = vmatpush1.msra.mxu0 0.0
      %1211 = vmatprep.subr.mxu0 0.0
      %1212 = vmatpush1.msra.mxu0 0.0
      %1213 = vmatprep.mubr.f32.mxu0 0.0
      %1214 = vmatmul.mubr.f32.gmra.mrb[0].mxu0 %v1054
      %v1215 = vpop.f32.mrb[0].mxu0
      %v1216 = vadd.f32 %v1050, %v1215
      %v1217 = vpop.f32.mrb[0].mxu0
      %1218 = vmatprep.mubr.f32.mxu0 0.0
      %1219 = vmatmul.mubr.f32.gmra.mrb[0].mxu0 %v1057
      %v1220 = vpop.f32.mrb[0].mxu0
      %v1221 = vadd.f32 %v1050, %v1220
      %v1222 = vpop.f32.mrb[0].mxu0
      %1223 = vmatprep.mubr.f32.mxu0 0.0
      %1224 = vmatmul.mubr.f32.gmra.mrb[0].mxu0 %v1060
      %v1225 = vpop.f32.mrb[0].mxu0
      %v1226 = vadd.f32 %v1050, %v1225
      %v1227 = vpop.f32.mrb[0].mxu0
      %1228 = vmatprep.mubr.f32.mxu0 0.0
      %1229 = vmatmul.mubr.f32.gmra.mrb[0].mxu0 %v1063
      %v1230 = vpop.f32.mrb[0].mxu0
      %v1231 = vadd.f32 %v1050, %v1230
      %v1232 = vpop.f32.mrb[0].mxu0
      %1233 = vmatprep.mubr.f32.mxu0 0.0
      %1234 = vmatmul.mubr.f32.gmra.mrb[0].mxu0 %v1066
      %v1235 = vpop.f32.mrb[0].mxu0
      %v1236 = vadd.f32 %v1050, %v1235
      %v1237 = vpop.f32.mrb[0].mxu0
      %1238 = vmatprep.mubr.f32.mxu0 0.0
      %1239 = vmatmul.mubr.f32.gmra.mrb[0].mxu0 %v1069
      %v1240 = vpop.f32.mrb[0].mxu0
      %v1241 = vadd.f32 %v1050, %v1240
      %v1242 = vpop.f32.mrb[0].mxu0
      %1243 = vmatprep.mubr.f32.mxu0 0.0
      %1244 = vmatmul.mubr.f32.gmra.mrb[0].mxu0 %v1072
      %v1245 = vpop.f32.mrb[0].mxu0
      %v1246 = vadd.f32 %v1050, %v1245
      %v1247 = vpop.f32.mrb[0].mxu0
      %1248 = vmatprep.mubr.f32.mxu0 0.0
      %1249 = vmatmul.mubr.f32.gmra.mrb[0].mxu0 %v1075
      %v1250 = vpop.f32.mrb[0].mxu0
      %v1251 = vadd.f32 %v1050, %v1250
      %v1252 = vpop.f32.mrb[0].mxu0
      %1253 = vmatprep.mubr.f32.mxu0 0.0
      %1254 = vmatmul.mubr.f32.gmra.mrb[0].mxu0 %v1078
      %v1255 = vpop.f32.mrb[0].mxu0
      %v1256 = vadd.f32 %v1050, %v1255
      %v1257 = vpop.f32.mrb[0].mxu0
      %1258 = vmatprep.mubr.f32.mxu0 0.0
      %1259 = vmatmul.mubr.f32.gmra.mrb[0].mxu0 %v1081
      %v1260 = vpop.f32.mrb[0].mxu0
      %v1261 = vadd.f32 %v1050, %v1260
      %v1262 = vpop.f32.mrb[0].mxu0
      %1263 = vmatprep.mubr.f32.mxu0 0.0
      %1264 = vmatmul.mubr.f32.gmra.mrb[0].mxu0 %v1084
      %v1265 = vpop.f32.mrb[0].mxu0
      %v1266 = vadd.f32 %v1050, %v1265
      %v1267 = vpop.f32.mrb[0].mxu0
      %1268 = vmatprep.mubr.f32.mxu0 0.0
      %1269 = vmatmul.mubr.f32.gmra.mrb[0].mxu0 %v1087
      %v1270 = vpop.f32.mrb[0].mxu0
      %v1271 = vadd.f32 %v1050, %v1270
      %v1272 = vpop.f32.mrb[0].mxu0
      %1273 = vmatprep.mubr.f32.mxu0 0.0
      %1274 = vmatmul.mubr.f32.gmra.mrb[0].mxu0 %v1090
      %v1275 = vpop.f32.mrb[0].mxu0
      %v1276 = vadd.f32 %v1050, %v1275
      %v1277 = vpop.f32.mrb[0].mxu0
      %1278 = vmatprep.mubr.f32.mxu0 0.0
      %1279 = vmatmul.mubr.f32.gmra.mrb[0].mxu0 %v1093
      %v1280 = vpop.f32.mrb[0].mxu0
      %v1281 = vadd.f32 %v1050, %v1280
      %v1282 = vpop.f32.mrb[0].mxu0
      %1283 = vmatprep.mubr.f32.mxu0 0.0
      %1284 = vmatmul.mubr.f32.gmra.mrb[0].mxu0 %v1096
      %v1285 = vpop.f32.mrb[0].mxu0
      %v1286 = vadd.f32 %v1050, %v1285
      %v1287 = vpop.f32.mrb[0].mxu0
      %1288 = vmatprep.mubr.f32.mxu0 0.0
      %1289 = vmatmul.mubr.f32.gmra.mrb[0].mxu0 %v1099
      %v1290 = vpop.f32.mrb[0].mxu0
      %v1291 = vadd.f32 %v1050, %v1290
      %v1292 = vpop.f32.mrb[0].mxu0
      %1293 = vmatprep.mubr.f32.mxu0 0.0
      %1294 = vmatmul.mubr.f32.gmra.mrb[0].mxu0 %v1102
      %v1295 = vpop.f32.mrb[0].mxu0
      %v1296 = vadd.f32 %v1050, %v1295
      %v1297 = vpop.f32.mrb[0].mxu0
      %1298 = vmatprep.mubr.f32.mxu0 0.0
      %1299 = vmatmul.mubr.f32.gmra.mrb[0].mxu0 %v1105
      %v1300 = vpop.f32.mrb[0].mxu0
      %v1301 = vadd.f32 %v1050, %v1300
      %v1302 = vpop.f32.mrb[0].mxu0
      %1303 = vmatprep.mubr.f32.mxu0 0.0
      %1304 = vmatmul.mubr.f32.gmra.mrb[0].mxu0 %v1108
      %v1305 = vpop.f32.mrb[0].mxu0
      %v1306 = vadd.f32 %v1050, %v1305
      %v1307 = vpop.f32.mrb[0].mxu0
      %1308 = vmatprep.mubr.f32.mxu0 0.0
      %1309 = vmatmul.mubr.f32.gmra.mrb[0].mxu0 %v1111
      %v1310 = vpop.f32.mrb[0].mxu0
      %v1311 = vadd.f32 %v1050, %v1310
      %v1312 = vpop.f32.mrb[0].mxu0
      %1313 = vmatprep.mubr.f32.mxu0 0.0
      %1314 = vmatmul.mubr.f32.gmra.mrb[0].mxu0 %v1114
      %v1315 = vpop.f32.mrb[0].mxu0
      %v1316 = vadd.f32 %v1050, %v1315
      %v1317 = vpop.f32.mrb[0].mxu0
      %1318 = vmatprep.mubr.f32.mxu0 0.0
      %1319 = vmatmul.mubr.f32.gmra.mrb[0].mxu0 %v1117
      %v1320 = vpop.f32.mrb[0].mxu0
      %v1321 = vadd.f32 %v1050, %v1320
      %v1322 = vpop.f32.mrb[0].mxu0
      %1323 = vmatprep.mubr.f32.mxu0 0.0
      %1324 = vmatmul.mubr.f32.gmra.mrb[0].mxu0 %v1120
      %v1325 = vpop.f32.mrb[0].mxu0
      %v1326 = vadd.f32 %v1050, %v1325
      %v1327 = vpop.f32.mrb[0].mxu0
      %1328 = vmatprep.mubr.f32.mxu0 0.0
      %1329 = vmatmul.mubr.f32.gmra.mrb[0].mxu0 %v1123
      %v1330 = vpop.f32.mrb[0].mxu0
      %v1331 = vadd.f32 %v1050, %v1330
      %v1332 = vpop.f32.mrb[0].mxu0
      %1333 = vmatprep.mubr.f32.mxu0 0.0
      %1334 = vmatmul.mubr.f32.gmra.mrb[0].mxu0 %v1126
      %v1335 = vpop.f32.mrb[0].mxu0
      %v1336 = vadd.f32 %v1050, %v1335
      %v1337 = vpop.f32.mrb[0].mxu0
      %1338 = vmatprep.mubr.f32.mxu0 0.0
      %1339 = vmatmul.mubr.f32.gmra.mrb[0].mxu0 %v1129
      %v1340 = vpop.f32.mrb[0].mxu0
      %v1341 = vadd.f32 %v1050, %v1340
      %v1342 = vpop.f32.mrb[0].mxu0
      %1343 = vmatprep.mubr.f32.mxu0 0.0
      %1344 = vmatmul.mubr.f32.gmra.mrb[0].mxu0 %v1132
      %v1345 = vpop.f32.mrb[0].mxu0
      %v1346 = vadd.f32 %v1050, %v1345
      %v1347 = vpop.f32.mrb[0].mxu0
      %1348 = vmatprep.mubr.f32.mxu0 0.0
      %1349 = vmatmul.mubr.f32.gmra.mrb[0].mxu0 %v1135
      %v1350 = vpop.f32.mrb[0].mxu0
      %v1351 = vadd.f32 %v1050, %v1350
      %v1352 = vpop.f32.mrb[0].mxu0
      %1353 = vmatprep.mubr.f32.mxu0 0.0
      %1354 = vmatmul.mubr.f32.gmra.mrb[0].mxu0 %v1138
      %v1355 = vpop.f32.mrb[0].mxu0
      %v1356 = vadd.f32 %v1050, %v1355
      %v1357 = vpop.f32.mrb[0].mxu0
      %1358 = vmatprep.mubr.f32.mxu0 0.0
      %1359 = vmatmul.mubr.f32.gmra.mrb[0].mxu0 %v1141
      %v1360 = vpop.f32.mrb[0].mxu0
      %v1361 = vadd.f32 %v1050, %v1360
      %v1362 = vpop.f32.mrb[0].mxu0
      %1363 = vmatprep.mubr.f32.mxu0 0.0
      %1364 = vmatmul.mubr.f32.gmra.mrb[0].mxu0 %v1144
      %v1365 = vpop.f32.mrb[0].mxu0
      %v1366 = vadd.f32 %v1050, %v1365
      %v1367 = vpop.f32.mrb[0].mxu0
      %1368 = vmatprep.mubr.f32.mxu0 0.0
      %1369 = vmatmul.mubr.f32.gmra.mrb[0].mxu0 %v1147
      %v1370 = vpop.f32.mrb[0].mxu0
      %v1371 = vadd.f32 %v1050, %v1370
      %v1372 = vpop.f32.mrb[0].mxu0
      %1373 = vdwg.mxu0
      %vm1374 = vcmask 97280
      %1375 = vst.msk [vmem:[%s280] sm:$0xff] %vm1374, %v1216
      %1376 = vst.msk [vmem:[%s280 + $0x8] sm:$0xff] %vm1374, %v1221
      %1377 = vst.msk [vmem:[%s280 + $0x10] sm:$0xff] %vm1374, %v1226
      %1378 = vst.msk [vmem:[%s280 + $0x18] sm:$0xff] %vm1374, %v1231
      %1379 = vst.msk [vmem:[%s280 + $0x20] sm:$0xff] %vm1374, %v1236
      %1380 = vst.msk [vmem:[%s280 + $0x28] sm:$0xff] %vm1374, %v1241
      %1381 = vst.msk [vmem:[%s280 + $0x30] sm:$0xff] %vm1374, %v1246
      %1382 = vst.msk [vmem:[%s280 + $0x38] sm:$0xff] %vm1374, %v1251
      %1383 = vst.msk [vmem:[%s280 + $0x40] sm:$0xff] %vm1374, %v1256
      %1384 = vst.msk [vmem:[%s280 + $0x48] sm:$0xff] %vm1374, %v1261
      %1385 = vst.msk [vmem:[%s280 + $0x50] sm:$0xff] %vm1374, %v1266
      %1386 = vst.msk [vmem:[%s280 + $0x58] sm:$0xff] %vm1374, %v1271
      %1387 = vst.msk [vmem:[%s280 + $0x60] sm:$0xff] %vm1374, %v1276
      %1388 = vst.msk [vmem:[%s280 + $0x68] sm:$0xff] %vm1374, %v1281
      %1389 = vst.msk [vmem:[%s280 + $0x70] sm:$0xff] %vm1374, %v1286
      %1390 = vst.msk [vmem:[%s280 + $0x78] sm:$0xff] %vm1374, %v1291
      %1391 = vst.msk [vmem:[%s280 + $0x80] sm:$0xff] %vm1374, %v1296
      %1392 = vst.msk [vmem:[%s280 + $0x88] sm:$0xff] %vm1374, %v1301
      %1393 = vst.msk [vmem:[%s280 + $0x90] sm:$0xff] %vm1374, %v1306
      %1394 = vst.msk [vmem:[%s280 + $0x98] sm:$0xff] %vm1374, %v1311
      %1395 = vst.msk [vmem:[%s280 + $0xa0] sm:$0xff] %vm1374, %v1316
      %1396 = vst.msk [vmem:[%s280 + $0xa8] sm:$0xff] %vm1374, %v1321
      %1397 = vst.msk [vmem:[%s280 + $0xb0] sm:$0xff] %vm1374, %v1326
      %1398 = vst.msk [vmem:[%s280 + $0xb8] sm:$0xff] %vm1374, %v1331
      %1399 = vst.msk [vmem:[%s280 + $0xc0] sm:$0xff] %vm1374, %v1336
      %1400 = vst.msk [vmem:[%s280 + $0xc8] sm:$0xff] %vm1374, %v1341
      %1401 = vst.msk [vmem:[%s280 + $0xd0] sm:$0xff] %vm1374, %v1346
      %1402 = vst.msk [vmem:[%s280 + $0xd8] sm:$0xff] %vm1374, %v1351
      %1403 = vst.msk [vmem:[%s280 + $0xe0] sm:$0xff] %vm1374, %v1356
      %1404 = vst.msk [vmem:[%s280 + $0xe8] sm:$0xff] %vm1374, %v1361
      %1405 = vst.msk [vmem:[%s280 + $0xf0] sm:$0xff] %vm1374, %v1366
      %1406 = vst.msk [vmem:[%s280 + $0xf8] sm:$0xff] %vm1374, %v1371
      %s1407 = smul.u32 32, %s18
      %p1408 = scmp.lt.s32.totalorder %s1407, 63
      %s1409 = scalar_select %p1408, %s1407, 63
      %s1410 = smul.addr %s1409, 8
      %s1411 = scalar_lea.vmem %s7, %s1410
      // Predicated region
      $region49: #{mlp_forward.1} parent=47 // pred_check
        %p1412 = pneg %p188
      $region50: #{mlp_forward.1} parent=47 // pred_check_branch
        %1414 = sbr.rel (%p1412) target = $region52
      $region51: #{mlp_forward.1} parent=47 // pred_region
        %s1415 = smul.u32 32, %s18
      $region52: #{mlp_forward.1} parent=47 // pred_fallthru
        _
    $region48: #{mlp_forward.1} parent=5 // pred_fallthru
      _
    %p1416 = scmp.le.s32.totalorder 2, %s13
    // Predicated region
    $region53: #{mlp_forward.1} parent=5 // pred_check
      %p1417 = pneg %p1416
    $region54: #{mlp_forward.1} parent=5 // pred_check_branch
      %1419 = sbr.rel (%p1417) target = $region56
    $region55: #{mlp_forward.1} parent=5 // pred_region
      %s1420 = ssub.s32 %s13, 2
      // Predicated region
      $region57: #{mlp_forward.1} parent=55 // pred_check
        %p1421 = pneg %p194
      $region58: #{mlp_forward.1} parent=55 // pred_check_branch
        %1423 = sbr.rel (%p1421) target = $region60
      $region59: #{mlp_forward.1} parent=55 // pred_region
        %s1424 = smul.u32 32, %s19
        %p1425 = scmp.lt.s32.totalorder %s1424, 63
        %s1426 = scalar_select %p1425, %s1424, 63
        %s1427 = smul.addr %s1426, 8
        %s1428 = scalar_lea.vmem %s7, %s1427
      $region60: #{mlp_forward.1} parent=55 // pred_fallthru
        _
    $region56: #{mlp_forward.1} parent=5 // pred_fallthru
      _
  $region6: #{mlp_forward.1} parent=0 // loop_footer
    %s17 = sadd.s32 1, %s13
  $region7: #{mlp_forward.1} parent=0 // loop_footer_branch
    %12 = sbr.rel target = $region3
  $region8: #{mlp_forward.1} parent=0 // loop_exit
    _

// kernel: mlp_forward.1
$region0: #{mlp_forward.1}
  #allocation0 [shape = 'u32[]', space=smem, size = 0x4, offset = 0x4, fixed_abs, tag = 'smem constant byte address 0x4 - core index']
  #allocation1 [shape = 'u32[144,128]{1,0:T(1,128)}', space=vmem, size = 0x12000, scoped, tag = 'internal scratch']
  %s0 = inlined_call_operand.vmem [shape: f32[512,32], index: 0, kind: input, shape index: {}]
  %s1 = inlined_call_operand.vmem [shape: f32[32,32], index: 1, kind: input, shape index: {}]
  %s2 = inlined_call_operand.vmem [shape: f32[1,32], index: 2, kind: input, shape index: {}]
  %s3 = inlined_call_operand.vmem [shape: f32[32,16], index: 3, kind: input, shape index: {}]
  %s4 = inlined_call_operand.vmem [shape: f32[1,16], index: 4, kind: input, shape index: {}]
  %s5 = inlined_call_operand.vmem [shape: f32[16,12], index: 5, kind: input, shape index: {}]
  %s6 = inlined_call_operand.vmem [shape: f32[1,12], index: 6, kind: input, shape index: {}]
  %s7 = inlined_call_operand.vmem [shape: f32[512,12], index: 7, kind: output, shape index: {}]
  %s8 = sld [smem:[#allocation0]]
  $region61: #{mlp_forward.1} parent=0
    _
  %s10 = ssub.s32 1, %s8
  %s11 = scalar_select 0, %s10, %s8
  loop: start=0, step=1, limit=4
  $region2: #{mlp_forward.1} parent=0 // loop_pre_header
    _
  $region3: #{mlp_forward.1} parent=0 // loop_header
    %s13 = sphi 0, %s17
    %p14 = scmp.ge.s32.totalorder %s13, 4
    %s23 = sphi 0, %s25
    %s26 = sphi 0, %s23
    %s27 = sphi 0, %s26
    %s43 = sphi 0, %s27
    %s47 = sphi 0, %s47
    %s49 = sphi 0, %s47
    %s50 = sphi 0, %s49
    %s64 = sphi 0, %s50
    %s68 = sphi 0, %s68
    %s70 = sphi 0, %s68
    %s71 = sphi 0, %s70
    %s85 = sphi 0, %s71
    %s89 = sphi 0, %s89
    %s91 = sphi 0, %s89
    %s92 = sphi 0, %s91
    %s106 = sphi 0, %s92
    %s110 = sphi 0, %s110
    %s112 = sphi 0, %s110
    %s113 = sphi 0, %s112
    %s127 = sphi 0, %s113
    %s131 = sphi 0, %s131
    %s133 = sphi 0, %s131
    %s134 = sphi 0, %s133
    %s148 = sphi 0, %s134
    %s152 = sphi 0, %s152
    %s154 = sphi 0, %s152
    %s155 = sphi 0, %s154
    %s169 = sphi 0, %s155
    %s175 = sphi 0, %s177
    %s178 = sphi 0, %s175
    %s179 = sphi 0, %s178
    %s195 = sphi 0, %s179
  $region4: #{mlp_forward.1} parent=0 // loop_header_branch
    %16 = sbr.rel (%p14) target = $region8
  $region5: #{mlp_forward.1} parent=0 // loop_body
    %s18 = ssub.s32 %s13, 1
    %s19 = ssub.s32 %s13, 2
    %s20 = sadd.s32 %s13, 1
    %s21 = ssub.s32 %s13, %s20
    %p22 = scmp.eq.s32.totalorder %s21, 0
    %s24 = sadd.s32 %s23, 1
    %s25 = scalar_select %p22, %s23, %s24
    %p28 = pneg %p22
    %p29 = scmp.eq.s32.totalorder %s13, 1
    %p30 = por %p28, %p29
    %p31 = scmp.ne.s32.totalorder %s23, %s26
    %p32 = scmp.eq.s32.totalorder %s13, 0
    %p33 = por %p31, %p32
    %p34 = scmp.ne.s32.totalorder %s23, %s26
    %p35 = scmp.eq.s32.totalorder %s18, 1
    %p36 = por %p34, %p35
    %p37 = scmp.ne.s32.totalorder %s26, %s27
    %p38 = scmp.eq.s32.totalorder %s18, 0
    %p39 = por %p37, %p38
    %p40 = scmp.ne.s32.totalorder %s26, %s27
    %p41 = scmp.eq.s32.totalorder %s19, 1
    %p42 = por %p40, %p41
    %p44 = scmp.ne.s32.totalorder %s27, %s43
    %p45 = scmp.eq.s32.totalorder %s19, 0
    %p46 = por %p44, %p45
    %s48 = sadd.s32 %s47, 1
    %p51 = scmp.eq.s32.totalorder %s13, 1
    %p52 = scmp.ne.s32.totalorder %s47, %s49
    %p53 = scmp.eq.s32.totalorder %s13, 0
    %p54 = por %p52, %p53
    %p55 = scmp.ne.s32.totalorder %s47, %s49
    %p56 = scmp.eq.s32.totalorder %s18, 1
    %p57 = por %p55, %p56
    %p58 = scmp.ne.s32.totalorder %s49, %s50
    %p59 = scmp.eq.s32.totalorder %s18, 0
    %p60 = por %p58, %p59
    %p61 = scmp.ne.s32.totalorder %s49, %s50
    %p62 = scmp.eq.s32.totalorder %s19, 1
    %p63 = por %p61, %p62
    %p65 = scmp.ne.s32.totalorder %s50, %s64
    %p66 = scmp.eq.s32.totalorder %s19, 0
    %p67 = por %p65, %p66
    %s69 = sadd.s32 %s68, 1
    %p72 = scmp.eq.s32.totalorder %s13, 1
    %p73 = scmp.ne.s32.totalorder %s68, %s70
    %p74 = scmp.eq.s32.totalorder %s13, 0
    %p75 = por %p73, %p74
    %p76 = scmp.ne.s32.totalorder %s68, %s70
    %p77 = scmp.eq.s32.totalorder %s18, 1
    %p78 = por %p76, %p77
    %p79 = scmp.ne.s32.totalorder %s70, %s71
    %p80 = scmp.eq.s32.totalorder %s18, 0
    %p81 = por %p79, %p80
    %p82 = scmp.ne.s32.totalorder %s70, %s71
    %p83 = scmp.eq.s32.totalorder %s19, 1
    %p84 = por %p82, %p83
    %p86 = scmp.ne.s32.totalorder %s71, %s85
    %p87 = scmp.eq.s32.totalorder %s19, 0
    %p88 = por %p86, %p87
    %s90 = sadd.s32 %s89, 1
    %p93 = scmp.eq.s32.totalorder %s13, 1
    %p94 = scmp.ne.s32.totalorder %s89, %s91
    %p95 = scmp.eq.s32.totalorder %s13, 0
    %p96 = por %p94, %p95
    %p97 = scmp.ne.s32.totalorder %s89, %s91
    %p98 = scmp.eq.s32.totalorder %s18, 1
    %p99 = por %p97, %p98
    %p100 = scmp.ne.s32.totalorder %s91, %s92
    %p101 = scmp.eq.s32.totalorder %s18, 0
    %p102 = por %p100, %p101
    %p103 = scmp.ne.s32.totalorder %s91, %s92
    %p104 = scmp.eq.s32.totalorder %s19, 1
    %p105 = por %p103, %p104
    %p107 = scmp.ne.s32.totalorder %s92, %s106
    %p108 = scmp.eq.s32.totalorder %s19, 0
    %p109 = por %p107, %p108
    %s111 = sadd.s32 %s110, 1
    %p114 = scmp.eq.s32.totalorder %s13, 1
    %p115 = scmp.ne.s32.totalorder %s110, %s112
    %p116 = scmp.eq.s32.totalorder %s13, 0
    %p117 = por %p115, %p116
    %p118 = scmp.ne.s32.totalorder %s110, %s112
    %p119 = scmp.eq.s32.totalorder %s18, 1
    %p120 = por %p118, %p119
    %p121 = scmp.ne.s32.totalorder %s112, %s113
    %p122 = scmp.eq.s32.totalorder %s18, 0
    %p123 = por %p121, %p122
    %p124 = scmp.ne.s32.totalorder %s112, %s113
    %p125 = scmp.eq.s32.totalorder %s19, 1
    %p126 = por %p124, %p125
    %p128 = scmp.ne.s32.totalorder %s113, %s127
    %p129 = scmp.eq.s32.totalorder %s19, 0
    %p130 = por %p128, %p129
    %s132 = sadd.s32 %s131, 1
    %p135 = scmp.eq.s32.totalorder %s13, 1
    %p136 = scmp.ne.s32.totalorder %s131, %s133
    %p137 = scmp.eq.s32.totalorder %s13, 0
    %p138 = por %p136, %p137
    %p139 = scmp.ne.s32.totalorder %s131, %s133
    %p140 = scmp.eq.s32.totalorder %s18, 1
    %p141 = por %p139, %p140
    %p142 = scmp.ne.s32.totalorder %s133, %s134
    %p143 = scmp.eq.s32.totalorder %s18, 0
    %p144 = por %p142, %p143
    %p145 = scmp.ne.s32.totalorder %s133, %s134
    %p146 = scmp.eq.s32.totalorder %s19, 1
    %p147 = por %p145, %p146
    %p149 = scmp.ne.s32.totalorder %s134, %s148
    %p150 = scmp.eq.s32.totalorder %s19, 0
    %p151 = por %p149, %p150
    %s153 = sadd.s32 %s152, 1
    %p156 = scmp.eq.s32.totalorder %s13, 1
    %p157 = scmp.ne.s32.totalorder %s152, %s154
    %p158 = scmp.eq.s32.totalorder %s13, 0
    %p159 = por %p157, %p158
    %p160 = scmp.ne.s32.totalorder %s152, %s154
    %p161 = scmp.eq.s32.totalorder %s18, 1
    %p162 = por %p160, %p161
    %p163 = scmp.ne.s32.totalorder %s154, %s155
    %p164 = scmp.eq.s32.totalorder %s18, 0
    %p165 = por %p163, %p164
    %p166 = scmp.ne.s32.totalorder %s154, %s155
    %p167 = scmp.eq.s32.totalorder %s19, 1
    %p168 = por %p166, %p167
    %p170 = scmp.ne.s32.totalorder %s155, %s169
    %p171 = scmp.eq.s32.totalorder %s19, 0
    %p172 = por %p170, %p171
    %s173 = ssub.s32 %s13, %s20
    %p174 = scmp.eq.s32.totalorder %s173, 0
    %s176 = sadd.s32 %s175, 1
    %s177 = scalar_select %p174, %s175, %s176
    %p180 = pneg %p174
    %p181 = scmp.eq.s32.totalorder %s13, 1
    %p182 = por %p180, %p181
    %p183 = scmp.ne.s32.totalorder %s175, %s178
    %p184 = scmp.eq.s32.totalorder %s13, 0
    %p185 = por %p183, %p184
    %p186 = scmp.ne.s32.totalorder %s175, %s178
    %p187 = scmp.eq.s32.totalorder %s18, 1
    %p188 = por %p186, %p187
    %p189 = scmp.ne.s32.totalorder %s178, %s179
    %p190 = scmp.eq.s32.totalorder %s18, 0
    %p191 = por %p189, %p190
    %p192 = scmp.ne.s32.totalorder %s178, %s179
    %p193 = scmp.eq.s32.totalorder %s19, 1
    %p194 = por %p192, %p193
    %p196 = scmp.ne.s32.totalorder %s179, %s195
    %p197 = scmp.eq.s32.totalorder %s19, 0
    %p198 = por %p196, %p197
    %p199 = scmp.le.s32.totalorder 1, %s13
    %p200 = scmp.lt.s32.totalorder %s13, 3
    %p201 = pnand %p199, %p200
    %p202 = pneg %p201
    // Predicated region
    $region9: #{mlp_forward.1} parent=5 // pred_check
      _
    $region10: #{mlp_forward.1} parent=5 // pred_check_branch
      %204 = sbr.rel (%p201) target = $region12
    $region11: #{mlp_forward.1} parent=5 // pred_region
      %s205 = ssub.s32 %s13, 1
      // Predicated region
      $region13: #{mlp_forward.1} parent=11 // pred_check
        %p206 = pneg %p60
      $region14: #{mlp_forward.1} parent=11 // pred_check_branch
        %208 = sbr.rel (%p206) target = $region16
      $region15: #{mlp_forward.1} parent=11 // pred_region
        _
      $region16: #{mlp_forward.1} parent=11 // pred_fallthru
        _
      // Predicated region
      $region17: #{mlp_forward.1} parent=11 // pred_check
        %p209 = pneg %p81
      $region18: #{mlp_forward.1} parent=11 // pred_check_branch
        %211 = sbr.rel (%p209) target = $region20
      $region19: #{mlp_forward.1} parent=11 // pred_region
        _
      $region20: #{mlp_forward.1} parent=11 // pred_fallthru
        _
      // Predicated region
      $region21: #{mlp_forward.1} parent=11 // pred_check
        %p212 = pneg %p102
      $region22: #{mlp_forward.1} parent=11 // pred_check_branch
        %214 = sbr.rel (%p212) target = $region24
      $region23: #{mlp_forward.1} parent=11 // pred_region
        _
      $region24: #{mlp_forward.1} parent=11 // pred_fallthru
        _
      // Predicated region
      $region25: #{mlp_forward.1} parent=11 // pred_check
        %p215 = pneg %p123
      $region26: #{mlp_forward.1} parent=11 // pred_check_branch
        %217 = sbr.rel (%p215) target = $region28
      $region27: #{mlp_forward.1} parent=11 // pred_region
        _
      $region28: #{mlp_forward.1} parent=11 // pred_fallthru
        _
      // Predicated region
      $region29: #{mlp_forward.1} parent=11 // pred_check
        %p218 = pneg %p144
      $region30: #{mlp_forward.1} parent=11 // pred_check_branch
        %220 = sbr.rel (%p218) target = $region32
      $region31: #{mlp_forward.1} parent=11 // pred_region
        _
      $region32: #{mlp_forward.1} parent=11 // pred_fallthru
        _
      // Predicated region
      $region33: #{mlp_forward.1} parent=11 // pred_check
        %p221 = pneg %p165
      $region34: #{mlp_forward.1} parent=11 // pred_check_branch
        %223 = sbr.rel (%p221) target = $region36
      $region35: #{mlp_forward.1} parent=11 // pred_region
        _
      $region36: #{mlp_forward.1} parent=11 // pred_fallthru
        _
    $region12: #{mlp_forward.1} parent=5 // pred_fallthru
      _
    %p224 = scmp.lt.s32.totalorder %s13, 2
    // Predicated region
    $region37: #{mlp_forward.1} parent=5 // pred_check
      %p225 = pneg %p224
    $region38: #{mlp_forward.1} parent=5 // pred_check_branch
      %227 = sbr.rel (%p225) target = $region40
    $region39: #{mlp_forward.1} parent=5 // pred_region
      // Predicated region
      $region41: #{mlp_forward.1} parent=39 // pred_check
        %p228 = pneg %p33
      $region42: #{mlp_forward.1} parent=39 // pred_check_branch
        %230 = sbr.rel (%p228) target = $region44
      $region43: #{mlp_forward.1} parent=39 // pred_region
        %s231 = smul.u32 32, %s13
        %p232 = scmp.lt.s32.totalorder %s231, 63
        %s233 = scalar_select %p232, %s231, 63
        %s234 = smul.addr %s233, 8
        %s235 = scalar_lea.vmem %s0, %s234
        %s236 = smul.u32 32, %s13
      $region44: #{mlp_forward.1} parent=39 // pred_fallthru
        _
    $region40: #{mlp_forward.1} parent=5 // pred_fallthru
      _
    %p237 = scmp.le.s32.totalorder 1, %s13
    %p238 = scmp.lt.s32.totalorder %s13, 3
    %p239 = pnand %p237, %p238
    %p240 = pneg %p239
    // Predicated region
    $region45: #{mlp_forward.1} parent=5 // pred_check
      _
    $region46: #{mlp_forward.1} parent=5 // pred_check_branch
      %242 = sbr.rel (%p239) target = $region48
    $region47: #{mlp_forward.1} parent=5 // pred_region
      %s243 = ssub.s32 %s13, 1
      %s244 = smul.u32 32, %s18
      %p245 = scmp.lt.s32.totalorder %s244, 63
      %s246 = scalar_select %p245, %s244, 63
      %s247 = smul.addr %s246, 8
      %s248 = scalar_lea.vmem %s0, %s247
      %p249 = pneg %p39
      %p250 = pneg %p36
      %p251 = pneg %p60
      %p252 = pneg %p57
      %p253 = pneg %p81
      %p254 = pneg %p78
      %p255 = pneg %p102
      %p256 = pneg %p99
      %p257 = pneg %p123
      %p258 = pneg %p120
      %p259 = pneg %p144
      %p260 = pneg %p141
      %p261 = pneg %p165
      %p262 = pneg %p162
      %p263 = pneg %p191
      %p264 = pneg %p188
      %s265 = smul.u32 32, %s18
      %p266 = scmp.lt.s32.totalorder %s265, 63
      %s267 = scalar_select %p266, %s265, 63
      %s268 = smul.addr %s267, 8
      %s269 = scalar_lea.vmem %s7, %s268
      %s270 = smul.u32 32, %s18
      %p271 = scmp.lt.s32.totalorder %s270, 63
      %s272 = scalar_select %p271, %s270, 63
      %s273 = smul.addr %s272, 8
      %s274 = scalar_lea.vmem %s0, %s273
      %s275 = smul.u32 32, %s18
      %s276 = smul.u32 32, %s18
      %p277 = scmp.lt.s32.totalorder %s276, 63
      %s278 = scalar_select %p277, %s276, 63
      %s279 = smul.addr %s278, 8
      %s280 = scalar_lea.vmem %s7, %s279
      %s281 = smul.u32 32, %s18
      %v282 = vld [vmem:[%s274] sm:$0xff]
      %v283 = vld [vmem:[%s274 + $0x8] sm:$0xff]
      %v284 = vld [vmem:[%s274 + $0x10] sm:$0xff]
      %v285 = vld [vmem:[%s274 + $0x18] sm:$0xff]
      %v286 = vld [vmem:[%s274 + $0x20] sm:$0xff]
      %v287 = vld [vmem:[%s274 + $0x28] sm:$0xff]
      %v288 = vld [vmem:[%s274 + $0x30] sm:$0xff]
      %v289 = vld [vmem:[%s274 + $0x38] sm:$0xff]
      %v290 = vld [vmem:[%s274 + $0x40] sm:$0xff]
      %v291 = vld [vmem:[%s274 + $0x48] sm:$0xff]
      %v292 = vld [vmem:[%s274 + $0x50] sm:$0xff]
      %v293 = vld [vmem:[%s274 + $0x58] sm:$0xff]
      %v294 = vld [vmem:[%s274 + $0x60] sm:$0xff]
      %v295 = vld [vmem:[%s274 + $0x68] sm:$0xff]
      %v296 = vld [vmem:[%s274 + $0x70] sm:$0xff]
      %v297 = vld [vmem:[%s274 + $0x78] sm:$0xff]
      %v298 = vld [vmem:[%s274 + $0x80] sm:$0xff]
      %v299 = vld [vmem:[%s274 + $0x88] sm:$0xff]
      %v300 = vld [vmem:[%s274 + $0x90] sm:$0xff]
      %v301 = vld [vmem:[%s274 + $0x98] sm:$0xff]
      %v302 = vld [vmem:[%s274 + $0xa0] sm:$0xff]
      %v303 = vld [vmem:[%s274 + $0xa8] sm:$0xff]
      %v304 = vld [vmem:[%s274 + $0xb0] sm:$0xff]
      %v305 = vld [vmem:[%s274 + $0xb8] sm:$0xff]
      %v306 = vld [vmem:[%s274 + $0xc0] sm:$0xff]
      %v307 = vld [vmem:[%s274 + $0xc8] sm:$0xff]
      %v308 = vld [vmem:[%s274 + $0xd0] sm:$0xff]
      %v309 = vld [vmem:[%s274 + $0xd8] sm:$0xff]
      %v310 = vld [vmem:[%s274 + $0xe0] sm:$0xff]
      %v311 = vld [vmem:[%s274 + $0xe8] sm:$0xff]
      %v312 = vld [vmem:[%s274 + $0xf0] sm:$0xff]
      %v313 = vld [vmem:[%s274 + $0xf8] sm:$0xff]
      %v314 = vld [vmem:[%s1] sm:$0xff]
      %v315 = vld [vmem:[%s1 + $0x8] sm:$0xff]
      %v316 = vld [vmem:[%s1 + $0x10] sm:$0xff]
      %v317 = vld [vmem:[%s1 + $0x18] sm:$0xff]
      %v318 = vld [vmem:[%s2] sm:$0x1]
      %v320 = vlaneseq
      %v321 = vshrl.u32 %v320, 7
      %v322 = vsub.s32 0, %v321
      %v323 = vrot.slane %v318, %v322
      %vm325 = vcmask 261120
      %v327 = vsel %vm325, %v282, 0
      %v330 = vsel %vm325, %v283, 0
      %v333 = vsel %vm325, %v284, 0
      %v336 = vsel %vm325, %v285, 0
      %v339 = vsel %vm325, %v286, 0
      %v342 = vsel %vm325, %v287, 0
      %v345 = vsel %vm325, %v288, 0
      %v348 = vsel %vm325, %v289, 0
      %v351 = vsel %vm325, %v290, 0
      %v354 = vsel %vm325, %v291, 0
      %v357 = vsel %vm325, %v292, 0
      %v360 = vsel %vm325, %v293, 0
      %v363 = vsel %vm325, %v294, 0
      %v366 = vsel %vm325, %v295, 0
      %v369 = vsel %vm325, %v296, 0
      %v372 = vsel %vm325, %v297, 0
      %v375 = vsel %vm325, %v298, 0
      %v378 = vsel %vm325, %v299, 0
      %v381 = vsel %vm325, %v300, 0
      %v384 = vsel %vm325, %v301, 0
      %v387 = vsel %vm325, %v302, 0
      %v390 = vsel %vm325, %v303, 0
      %v393 = vsel %vm325, %v304, 0
      %v396 = vsel %vm325, %v305, 0
      %v399 = vsel %vm325, %v306, 0
      %v402 = vsel %vm325, %v307, 0
      %v405 = vsel %vm325, %v308, 0
      %v408 = vsel %vm325, %v309, 0
      %v411 = vsel %vm325, %v310, 0
      %v414 = vsel %vm325, %v311, 0
      %v417 = vsel %vm325, %v312, 0
      %v420 = vsel %vm325, %v313, 0
      %422 = vmatprep.subr.mxu0 0.0
      %423 = vmatpush1.msra.mxu0 %v314
      %424 = vmatprep.subr.mxu0 0.0
      %425 = vmatpush1.msra.mxu0 %v315
      %426 = vmatprep.subr.mxu0 0.0
      %427 = vmatpush1.msra.mxu0 %v316
      %428 = vmatprep.subr.mxu0 0.0
      %429 = vmatpush1.msra.mxu0 %v317
      %430 = vmatprep.subr.mxu0 0.0
      %431 = vmatpush1.msra.mxu0 0.0
      %432 = vmatprep.subr.mxu0 0.0
      %433 = vmatpush1.msra.mxu0 0.0
      %434 = vmatprep.subr.mxu0 0.0
      %435 = vmatpush1.msra.mxu0 0.0
      %436 = vmatprep.subr.mxu0 0.0
      %437 = vmatpush1.msra.mxu0 0.0
      %438 = vmatprep.subr.mxu0 0.0
      %439 = vmatpush1.msra.mxu0 0.0
      %440 = vmatprep.subr.mxu0 0.0
      %441 = vmatpush1.msra.mxu0 0.0
      %442 = vmatprep.subr.mxu0 0.0
      %443 = vmatpush1.msra.mxu0 0.0
      %444 = vmatprep.subr.mxu0 0.0
      %445 = vmatpush1.msra.mxu0 0.0
      %446 = vmatprep.subr.mxu0 0.0
      %447 = vmatpush1.msra.mxu0 0.0
      %448 = vmatprep.subr.mxu0 0.0
      %449 = vmatpush1.msra.mxu0 0.0
      %450 = vmatprep.subr.mxu0 0.0
      %451 = vmatpush1.msra.mxu0 0.0
      %452 = vmatprep.subr.mxu0 0.0
      %453 = vmatpush1.msra.mxu0 0.0
      %454 = vmatprep.subr.mxu0 0.0
      %455 = vmatpush1.msra.mxu0 0.0
      %456 = vmatprep.subr.mxu0 0.0
      %457 = vmatpush1.msra.mxu0 0.0
      %458 = vmatprep.subr.mxu0 0.0
      %459 = vmatpush1.msra.mxu0 0.0
      %460 = vmatprep.subr.mxu0 0.0
      %461 = vmatpush1.msra.mxu0 0.0
      %462 = vmatprep.subr.mxu0 0.0
      %463 = vmatpush1.msra.mxu0 0.0
      %464 = vmatprep.subr.mxu0 0.0
      %465 = vmatpush1.msra.mxu0 0.0
      %466 = vmatprep.subr.mxu0 0.0
      %467 = vmatpush1.msra.mxu0 0.0
      %468 = vmatprep.subr.mxu0 0.0
      %469 = vmatpush1.msra.mxu0 0.0
      %470 = vmatprep.subr.mxu0 0.0
      %471 = vmatpush1.msra.mxu0 0.0
      %472 = vmatprep.subr.mxu0 0.0
      %473 = vmatpush1.msra.mxu0 0.0
      %474 = vmatprep.subr.mxu0 0.0
      %475 = vmatpush1.msra.mxu0 0.0
      %476 = vmatprep.subr.mxu0 0.0
      %477 = vmatpush1.msra.mxu0 0.0
      %478 = vmatprep.subr.mxu0 0.0
      %479 = vmatpush1.msra.mxu0 0.0
      %480 = vmatprep.subr.mxu0 0.0
      %481 = vmatpush1.msra.mxu0 0.0
      %482 = vmatprep.subr.mxu0 0.0
      %483 = vmatpush1.msra.mxu0 0.0
      %484 = vmatprep.subr.mxu0 0.0
      %485 = vmatpush1.msra.mxu0 0.0
      %486 = vmatprep.mubr.f32.mxu0 0.0
      %487 = vmatmul.mubr.f32.gmra.mrb[0].mxu0 %v327
      %v488 = vpop.f32.mrb[0].mxu0
      %v489 = vadd.f32 %v323, %v488
      %v490 = vpop.f32.mrb[0].mxu0
      %491 = vmatprep.mubr.f32.mxu0 0.0
      %492 = vmatmul.mubr.f32.gmra.mrb[0].mxu0 %v330
      %v493 = vpop.f32.mrb[0].mxu0
      %v494 = vadd.f32 %v323, %v493
      %v495 = vpop.f32.mrb[0].mxu0
      %496 = vmatprep.mubr.f32.mxu0 0.0
      %497 = vmatmul.mubr.f32.gmra.mrb[0].mxu0 %v333
      %v498 = vpop.f32.mrb[0].mxu0
      %v499 = vadd.f32 %v323, %v498
      %v500 = vpop.f32.mrb[0].mxu0
      %501 = vmatprep.mubr.f32.mxu0 0.0
      %502 = vmatmul.mubr.f32.gmra.mrb[0].mxu0 %v336
      %v503 = vpop.f32.mrb[0].mxu0
      %v504 = vadd.f32 %v323, %v503
      %v505 = vpop.f32.mrb[0].mxu0
      %506 = vmatprep.mubr.f32.mxu0 0.0
      %507 = vmatmul.mubr.f32.gmra.mrb[0].mxu0 %v339
      %v508 = vpop.f32.mrb[0].mxu0
      %v509 = vadd.f32 %v323, %v508
      %v510 = vpop.f32.mrb[0].mxu0
      %511 = vmatprep.mubr.f32.mxu0 0.0
      %512 = vmatmul.mubr.f32.gmra.mrb[0].mxu0 %v342
      %v513 = vpop.f32.mrb[0].mxu0
      %v514 = vadd.f32 %v323, %v513
      %v515 = vpop.f32.mrb[0].mxu0
      %516 = vmatprep.mubr.f32.mxu0 0.0
      %517 = vmatmul.mubr.f32.gmra.mrb[0].mxu0 %v345
      %v518 = vpop.f32.mrb[0].mxu0
      %v519 = vadd.f32 %v323, %v518
      %v520 = vpop.f32.mrb[0].mxu0
      %521 = vmatprep.mubr.f32.mxu0 0.0
      %522 = vmatmul.mubr.f32.gmra.mrb[0].mxu0 %v348
      %v523 = vpop.f32.mrb[0].mxu0
      %v524 = vadd.f32 %v323, %v523
      %v525 = vpop.f32.mrb[0].mxu0
      %526 = vmatprep.mubr.f32.mxu0 0.0
      %527 = vmatmul.mubr.f32.gmra.mrb[0].mxu0 %v351
      %v528 = vpop.f32.mrb[0].mxu0
      %v529 = vadd.f32 %v323, %v528
      %v530 = vpop.f32.mrb[0].mxu0
      %531 = vmatprep.mubr.f32.mxu0 0.0
      %532 = vmatmul.mubr.f32.gmra.mrb[0].mxu0 %v354
      %v533 = vpop.f32.mrb[0].mxu0
      %v534 = vadd.f32 %v323, %v533
      %v535 = vpop.f32.mrb[0].mxu0
      %536 = vmatprep.mubr.f32.mxu0 0.0
      %537 = vmatmul.mubr.f32.gmra.mrb[0].mxu0 %v357
      %v538 = vpop.f32.mrb[0].mxu0
      %v539 = vadd.f32 %v323, %v538
      %v540 = vpop.f32.mrb[0].mxu0
      %541 = vmatprep.mubr.f32.mxu0 0.0
      %542 = vmatmul.mubr.f32.gmra.mrb[0].mxu0 %v360
      %v543 = vpop.f32.mrb[0].mxu0
      %v544 = vadd.f32 %v323, %v543
      %v545 = vpop.f32.mrb[0].mxu0
      %546 = vmatprep.mubr.f32.mxu0 0.0
      %547 = vmatmul.mubr.f32.gmra.mrb[0].mxu0 %v363
      %v548 = vpop.f32.mrb[0].mxu0
      %v549 = vadd.f32 %v323, %v548
      %v550 = vpop.f32.mrb[0].mxu0
      %551 = vmatprep.mubr.f32.mxu0 0.0
      %552 = vmatmul.mubr.f32.gmra.mrb[0].mxu0 %v366
      %v553 = vpop.f32.mrb[0].mxu0
      %v554 = vadd.f32 %v323, %v553
      %v555 = vpop.f32.mrb[0].mxu0
      %556 = vmatprep.mubr.f32.mxu0 0.0
      %557 = vmatmul.mubr.f32.gmra.mrb[0].mxu0 %v369
      %v558 = vpop.f32.mrb[0].mxu0
      %v559 = vadd.f32 %v323, %v558
      %v560 = vpop.f32.mrb[0].mxu0
      %561 = vmatprep.mubr.f32.mxu0 0.0
      %562 = vmatmul.mubr.f32.gmra.mrb[0].mxu0 %v372
      %v563 = vpop.f32.mrb[0].mxu0
      %v564 = vadd.f32 %v323, %v563
      %v565 = vpop.f32.mrb[0].mxu0
      %566 = vmatprep.mubr.f32.mxu0 0.0
      %567 = vmatmul.mubr.f32.gmra.mrb[0].mxu0 %v375
      %v568 = vpop.f32.mrb[0].mxu0
      %v569 = vadd.f32 %v323, %v568
      %v570 = vpop.f32.mrb[0].mxu0
      %571 = vmatprep.mubr.f32.mxu0 0.0
      %572 = vmatmul.mubr.f32.gmra.mrb[0].mxu0 %v378
      %v573 = vpop.f32.mrb[0].mxu0
      %v574 = vadd.f32 %v323, %v573
      %v575 = vpop.f32.mrb[0].mxu0
      %576 = vmatprep.mubr.f32.mxu0 0.0
      %577 = vmatmul.mubr.f32.gmra.mrb[0].mxu0 %v381
      %v578 = vpop.f32.mrb[0].mxu0
      %v579 = vadd.f32 %v323, %v578
      %v580 = vpop.f32.mrb[0].mxu0
      %581 = vmatprep.mubr.f32.mxu0 0.0
      %582 = vmatmul.mubr.f32.gmra.mrb[0].mxu0 %v384
      %v583 = vpop.f32.mrb[0].mxu0
      %v584 = vadd.f32 %v323, %v583
      %v585 = vpop.f32.mrb[0].mxu0
      %586 = vmatprep.mubr.f32.mxu0 0.0
      %587 = vmatmul.mubr.f32.gmra.mrb[0].mxu0 %v387
      %v588 = vpop.f32.mrb[0].mxu0
      %v589 = vadd.f32 %v323, %v588
      %v590 = vpop.f32.mrb[0].mxu0
      %591 = vmatprep.mubr.f32.mxu0 0.0
      %592 = vmatmul.mubr.f32.gmra.mrb[0].mxu0 %v390
      %v593 = vpop.f32.mrb[0].mxu0
      %v594 = vadd.f32 %v323, %v593
      %v595 = vpop.f32.mrb[0].mxu0
      %596 = vmatprep.mubr.f32.mxu0 0.0
      %597 = vmatmul.mubr.f32.gmra.mrb[0].mxu0 %v393
      %v598 = vpop.f32.mrb[0].mxu0
      %v599 = vadd.f32 %v323, %v598
      %v600 = vpop.f32.mrb[0].mxu0
      %601 = vmatprep.mubr.f32.mxu0 0.0
      %602 = vmatmul.mubr.f32.gmra.mrb[0].mxu0 %v396
      %v603 = vpop.f32.mrb[0].mxu0
      %v604 = vadd.f32 %v323, %v603
      %v605 = vpop.f32.mrb[0].mxu0
      %606 = vmatprep.mubr.f32.mxu0 0.0
      %607 = vmatmul.mubr.f32.gmra.mrb[0].mxu0 %v399
      %v608 = vpop.f32.mrb[0].mxu0
      %v609 = vadd.f32 %v323, %v608
      %v610 = vpop.f32.mrb[0].mxu0
      %611 = vmatprep.mubr.f32.mxu0 0.0
      %612 = vmatmul.mubr.f32.gmra.mrb[0].mxu0 %v402
      %v613 = vpop.f32.mrb[0].mxu0
      %v614 = vadd.f32 %v323, %v613
      %v615 = vpop.f32.mrb[0].mxu0
      %616 = vmatprep.mubr.f32.mxu0 0.0
      %617 = vmatmul.mubr.f32.gmra.mrb[0].mxu0 %v405
      %v618 = vpop.f32.mrb[0].mxu0
      %v619 = vadd.f32 %v323, %v618
      %v620 = vpop.f32.mrb[0].mxu0
      %621 = vmatprep.mubr.f32.mxu0 0.0
      %622 = vmatmul.mubr.f32.gmra.mrb[0].mxu0 %v408
      %v623 = vpop.f32.mrb[0].mxu0
      %v624 = vadd.f32 %v323, %v623
      %v625 = vpop.f32.mrb[0].mxu0
      %626 = vmatprep.mubr.f32.mxu0 0.0
      %627 = vmatmul.mubr.f32.gmra.mrb[0].mxu0 %v411
      %v628 = vpop.f32.mrb[0].mxu0
      %v629 = vadd.f32 %v323, %v628
      %v630 = vpop.f32.mrb[0].mxu0
      %631 = vmatprep.mubr.f32.mxu0 0.0
      %632 = vmatmul.mubr.f32.gmra.mrb[0].mxu0 %v414
      %v633 = vpop.f32.mrb[0].mxu0
      %v634 = vadd.f32 %v323, %v633
      %v635 = vpop.f32.mrb[0].mxu0
      %636 = vmatprep.mubr.f32.mxu0 0.0
      %637 = vmatmul.mubr.f32.gmra.mrb[0].mxu0 %v417
      %v638 = vpop.f32.mrb[0].mxu0
      %v639 = vadd.f32 %v323, %v638
      %v640 = vpop.f32.mrb[0].mxu0
      %641 = vmatprep.mubr.f32.mxu0 0.0
      %642 = vmatmul.mubr.f32.gmra.mrb[0].mxu0 %v420
      %v643 = vpop.f32.mrb[0].mxu0
      %v644 = vadd.f32 %v323, %v643
      %v645 = vpop.f32.mrb[0].mxu0
      %646 = vdwg.mxu0
      %v647 = vmax.f32 %v489, 0.0
      %v648 = vmax.f32 %v494, 0.0
      %v649 = vmax.f32 %v499, 0.0
      %v650 = vmax.f32 %v504, 0.0
      %v651 = vmax.f32 %v509, 0.0
      %v652 = vmax.f32 %v514, 0.0
      %v653 = vmax.f32 %v519, 0.0
      %v654 = vmax.f32 %v524, 0.0
      %v655 = vmax.f32 %v529, 0.0
      %v656 = vmax.f32 %v534, 0.0
      %v657 = vmax.f32 %v539, 0.0
      %v658 = vmax.f32 %v544, 0.0
      %v659 = vmax.f32 %v549, 0.0
      %v660 = vmax.f32 %v554, 0.0
      %v661 = vmax.f32 %v559, 0.0
      %v662 = vmax.f32 %v564, 0.0
      %v663 = vmax.f32 %v569, 0.0
      %v664 = vmax.f32 %v574, 0.0
      %v665 = vmax.f32 %v579, 0.0
      %v666 = vmax.f32 %v584, 0.0
      %v667 = vmax.f32 %v589, 0.0
      %v668 = vmax.f32 %v594, 0.0
      %v669 = vmax.f32 %v599, 0.0
      %v670 = vmax.f32 %v604, 0.0
      %v671 = vmax.f32 %v609, 0.0
      %v672 = vmax.f32 %v614, 0.0
      %v673 = vmax.f32 %v619, 0.0
      %v674 = vmax.f32 %v624, 0.0
      %v675 = vmax.f32 %v629, 0.0
      %v676 = vmax.f32 %v634, 0.0
      %v677 = vmax.f32 %v639, 0.0
      %v678 = vmax.f32 %v644, 0.0
      %v679 = vld [vmem:[%s3] sm:$0xff]
      %v680 = vld [vmem:[%s3 + $0x8] sm:$0xff]
      %v681 = vld [vmem:[%s3 + $0x10] sm:$0xff]
      %v682 = vld [vmem:[%s3 + $0x18] sm:$0xff]
      %v683 = vld [vmem:[%s4] sm:$0x1]
      %v685 = vlaneseq
      %v686 = vshrl.u32 %v685, 7
      %v687 = vsub.s32 0, %v686
      %v688 = vrot.slane %v683, %v687
      %v691 = vsel %vm325, %v647, 0
      %v694 = vsel %vm325, %v648, 0
      %v697 = vsel %vm325, %v649, 0
      %v700 = vsel %vm325, %v650, 0
      %v703 = vsel %vm325, %v651, 0
      %v706 = vsel %vm325, %v652, 0
      %v709 = vsel %vm325, %v653, 0
      %v712 = vsel %vm325, %v654, 0
      %v715 = vsel %vm325, %v655, 0
      %v718 = vsel %vm325, %v656, 0
      %v721 = vsel %vm325, %v657, 0
      %v724 = vsel %vm325, %v658, 0
      %v727 = vsel %vm325, %v659, 0
      %v730 = vsel %vm325, %v660, 0
      %v733 = vsel %vm325, %v661, 0
      %v736 = vsel %vm325, %v662, 0
      %v739 = vsel %vm325, %v663, 0
      %v742 = vsel %vm325, %v664, 0
      %v745 = vsel %vm325, %v665, 0
      %v748 = vsel %vm325, %v666, 0
      %v751 = vsel %vm325, %v667, 0
      %v754 = vsel %vm325, %v668, 0
      %v757 = vsel %vm325, %v669, 0
      %v760 = vsel %vm325, %v670, 0
      %v763 = vsel %vm325, %v671, 0
      %v766 = vsel %vm325, %v672, 0
      %v769 = vsel %vm325, %v673, 0
      %v772 = vsel %vm325, %v674, 0
      %v775 = vsel %vm325, %v675, 0
      %v778 = vsel %vm325, %v676, 0
      %v781 = vsel %vm325, %v677, 0
      %v784 = vsel %vm325, %v678, 0
      %786 = vmatprep.subr.mxu0 0.0
      %787 = vmatpush1.msra.mxu0 %v679
      %788 = vmatprep.subr.mxu0 0.0
      %789 = vmatpush1.msra.mxu0 %v680
      %790 = vmatprep.subr.mxu0 0.0
      %791 = vmatpush1.msra.mxu0 %v681
      %792 = vmatprep.subr.mxu0 0.0
      %793 = vmatpush1.msra.mxu0 %v682
      %794 = vmatprep.subr.mxu0 0.0
      %795 = vmatpush1.msra.mxu0 0.0
      %796 = vmatprep.subr.mxu0 0.0
      %797 = vmatpush1.msra.mxu0 0.0
      %798 = vmatprep.subr.mxu0 0.0
      %799 = vmatpush1.msra.mxu0 0.0
      %800 = vmatprep.subr.mxu0 0.0
      %801 = vmatpush1.msra.mxu0 0.0
      %802 = vmatprep.subr.mxu0 0.0
      %803 = vmatpush1.msra.mxu0 0.0
      %804 = vmatprep.subr.mxu0 0.0
      %805 = vmatpush1.msra.mxu0 0.0
      %806 = vmatprep.subr.mxu0 0.0
      %807 = vmatpush1.msra.mxu0 0.0
      %808 = vmatprep.subr.mxu0 0.0
      %809 = vmatpush1.msra.mxu0 0.0
      %810 = vmatprep.subr.mxu0 0.0
      %811 = vmatpush1.msra.mxu0 0.0
      %812 = vmatprep.subr.mxu0 0.0
      %813 = vmatpush1.msra.mxu0 0.0
      %814 = vmatprep.subr.mxu0 0.0
      %815 = vmatpush1.msra.mxu0 0.0
      %816 = vmatprep.subr.mxu0 0.0
      %817 = vmatpush1.msra.mxu0 0.0
      %818 = vmatprep.subr.mxu0 0.0
      %819 = vmatpush1.msra.mxu0 0.0
      %820 = vmatprep.subr.mxu0 0.0
      %821 = vmatpush1.msra.mxu0 0.0
      %822 = vmatprep.subr.mxu0 0.0
      %823 = vmatpush1.msra.mxu0 0.0
      %824 = vmatprep.subr.mxu0 0.0
      %825 = vmatpush1.msra.mxu0 0.0
      %826 = vmatprep.subr.mxu0 0.0
      %827 = vmatpush1.msra.mxu0 0.0
      %828 = vmatprep.subr.mxu0 0.0
      %829 = vmatpush1.msra.mxu0 0.0
      %830 = vmatprep.subr.mxu0 0.0
      %831 = vmatpush1.msra.mxu0 0.0
      %832 = vmatprep.subr.mxu0 0.0
      %833 = vmatpush1.msra.mxu0 0.0
      %834 = vmatprep.subr.mxu0 0.0
      %835 = vmatpush1.msra.mxu0 0.0
      %836 = vmatprep.subr.mxu0 0.0
      %837 = vmatpush1.msra.mxu0 0.0
      %838 = vmatprep.subr.mxu0 0.0
      %839 = vmatpush1.msra.mxu0 0.0
      %840 = vmatprep.subr.mxu0 0.0
      %841 = vmatpush1.msra.mxu0 0.0
      %842 = vmatprep.subr.mxu0 0.0
      %843 = vmatpush1.msra.mxu0 0.0
      %844 = vmatprep.subr.mxu0 0.0
      %845 = vmatpush1.msra.mxu0 0.0
      %846 = vmatprep.subr.mxu0 0.0
      %847 = vmatpush1.msra.mxu0 0.0
      %848 = vmatprep.subr.mxu0 0.0
      %849 = vmatpush1.msra.mxu0 0.0
      %850 = vmatprep.mubr.f32.mxu0 0.0
      %851 = vmatmul.mubr.f32.gmra.mrb[0].mxu0 %v691
      %v852 = vpop.f32.mrb[0].mxu0
      %v853 = vadd.f32 %v688, %v852
      %v854 = vpop.f32.mrb[0].mxu0
      %855 = vmatprep.mubr.f32.mxu0 0.0
      %856 = vmatmul.mubr.f32.gmra.mrb[0].mxu0 %v694
      %v857 = vpop.f32.mrb[0].mxu0
      %v858 = vadd.f32 %v688, %v857
      %v859 = vpop.f32.mrb[0].mxu0
      %860 = vmatprep.mubr.f32.mxu0 0.0
      %861 = vmatmul.mubr.f32.gmra.mrb[0].mxu0 %v697
      %v862 = vpop.f32.mrb[0].mxu0
      %v863 = vadd.f32 %v688, %v862
      %v864 = vpop.f32.mrb[0].mxu0
      %865 = vmatprep.mubr.f32.mxu0 0.0
      %866 = vmatmul.mubr.f32.gmra.mrb[0].mxu0 %v700
      %v867 = vpop.f32.mrb[0].mxu0
      %v868 = vadd.f32 %v688, %v867
      %v869 = vpop.f32.mrb[0].mxu0
      %870 = vmatprep.mubr.f32.mxu0 0.0
      %871 = vmatmul.mubr.f32.gmra.mrb[0].mxu0 %v703
      %v872 = vpop.f32.mrb[0].mxu0
      %v873 = vadd.f32 %v688, %v872
      %v874 = vpop.f32.mrb[0].mxu0
      %875 = vmatprep.mubr.f32.mxu0 0.0
      %876 = vmatmul.mubr.f32.gmra.mrb[0].mxu0 %v706
      %v877 = vpop.f32.mrb[0].mxu0
      %v878 = vadd.f32 %v688, %v877
      %v879 = vpop.f32.mrb[0].mxu0
      %880 = vmatprep.mubr.f32.mxu0 0.0
      %881 = vmatmul.mubr.f32.gmra.mrb[0].mxu0 %v709
      %v882 = vpop.f32.mrb[0].mxu0
      %v883 = vadd.f32 %v688, %v882
      %v884 = vpop.f32.mrb[0].mxu0
      %885 = vmatprep.mubr.f32.mxu0 0.0
      %886 = vmatmul.mubr.f32.gmra.mrb[0].mxu0 %v712
      %v887 = vpop.f32.mrb[0].mxu0
      %v888 = vadd.f32 %v688, %v887
      %v889 = vpop.f32.mrb[0].mxu0
      %890 = vmatprep.mubr.f32.mxu0 0.0
      %891 = vmatmul.mubr.f32.gmra.mrb[0].mxu0 %v715
      %v892 = vpop.f32.mrb[0].mxu0
      %v893 = vadd.f32 %v688, %v892
      %v894 = vpop.f32.mrb[0].mxu0
      %895 = vmatprep.mubr.f32.mxu0 0.0
      %896 = vmatmul.mubr.f32.gmra.mrb[0].mxu0 %v718
      %v897 = vpop.f32.mrb[0].mxu0
      %v898 = vadd.f32 %v688, %v897
      %v899 = vpop.f32.mrb[0].mxu0
      %900 = vmatprep.mubr.f32.mxu0 0.0
      %901 = vmatmul.mubr.f32.gmra.mrb[0].mxu0 %v721
      %v902 = vpop.f32.mrb[0].mxu0
      %v903 = vadd.f32 %v688, %v902
      %v904 = vpop.f32.mrb[0].mxu0
      %905 = vmatprep.mubr.f32.mxu0 0.0
      %906 = vmatmul.mubr.f32.gmra.mrb[0].mxu0 %v724
      %v907 = vpop.f32.mrb[0].mxu0
      %v908 = vadd.f32 %v688, %v907
      %v909 = vpop.f32.mrb[0].mxu0
      %910 = vmatprep.mubr.f32.mxu0 0.0
      %911 = vmatmul.mubr.f32.gmra.mrb[0].mxu0 %v727
      %v912 = vpop.f32.mrb[0].mxu0
      %v913 = vadd.f32 %v688, %v912
      %v914 = vpop.f32.mrb[0].mxu0
      %915 = vmatprep.mubr.f32.mxu0 0.0
      %916 = vmatmul.mubr.f32.gmra.mrb[0].mxu0 %v730
      %v917 = vpop.f32.mrb[0].mxu0
      %v918 = vadd.f32 %v688, %v917
      %v919 = vpop.f32.mrb[0].mxu0
      %920 = vmatprep.mubr.f32.mxu0 0.0
      %921 = vmatmul.mubr.f32.gmra.mrb[0].mxu0 %v733
      %v922 = vpop.f32.mrb[0].mxu0
      %v923 = vadd.f32 %v688, %v922
      %v924 = vpop.f32.mrb[0].mxu0
      %925 = vmatprep.mubr.f32.mxu0 0.0
      %926 = vmatmul.mubr.f32.gmra.mrb[0].mxu0 %v736
      %v927 = vpop.f32.mrb[0].mxu0
      %v928 = vadd.f32 %v688, %v927
      %v929 = vpop.f32.mrb[0].mxu0
      %930 = vmatprep.mubr.f32.mxu0 0.0
      %931 = vmatmul.mubr.f32.gmra.mrb[0].mxu0 %v739
      %v932 = vpop.f32.mrb[0].mxu0
      %v933 = vadd.f32 %v688, %v932
      %v934 = vpop.f32.mrb[0].mxu0
      %935 = vmatprep.mubr.f32.mxu0 0.0
      %936 = vmatmul.mubr.f32.gmra.mrb[0].mxu0 %v742
      %v937 = vpop.f32.mrb[0].mxu0
      %v938 = vadd.f32 %v688, %v937
      %v939 = vpop.f32.mrb[0].mxu0
      %940 = vmatprep.mubr.f32.mxu0 0.0
      %941 = vmatmul.mubr.f32.gmra.mrb[0].mxu0 %v745
      %v942 = vpop.f32.mrb[0].mxu0
      %v943 = vadd.f32 %v688, %v942
      %v944 = vpop.f32.mrb[0].mxu0
      %945 = vmatprep.mubr.f32.mxu0 0.0
      %946 = vmatmul.mubr.f32.gmra.mrb[0].mxu0 %v748
      %v947 = vpop.f32.mrb[0].mxu0
      %v948 = vadd.f32 %v688, %v947
      %v949 = vpop.f32.mrb[0].mxu0
      %950 = vmatprep.mubr.f32.mxu0 0.0
      %951 = vmatmul.mubr.f32.gmra.mrb[0].mxu0 %v751
      %v952 = vpop.f32.mrb[0].mxu0
      %v953 = vadd.f32 %v688, %v952
      %v954 = vpop.f32.mrb[0].mxu0
      %955 = vmatprep.mubr.f32.mxu0 0.0
      %956 = vmatmul.mubr.f32.gmra.mrb[0].mxu0 %v754
      %v957 = vpop.f32.mrb[0].mxu0
      %v958 = vadd.f32 %v688, %v957
      %v959 = vpop.f32.mrb[0].mxu0
      %960 = vmatprep.mubr.f32.mxu0 0.0
      %961 = vmatmul.mubr.f32.gmra.mrb[0].mxu0 %v757
      %v962 = vpop.f32.mrb[0].mxu0
      %v963 = vadd.f32 %v688, %v962
      %v964 = vpop.f32.mrb[0].mxu0
      %965 = vmatprep.mubr.f32.mxu0 0.0
      %966 = vmatmul.mubr.f32.gmra.mrb[0].mxu0 %v760
      %v967 = vpop.f32.mrb[0].mxu0
      %v968 = vadd.f32 %v688, %v967
      %v969 = vpop.f32.mrb[0].mxu0
      %970 = vmatprep.mubr.f32.mxu0 0.0
      %971 = vmatmul.mubr.f32.gmra.mrb[0].mxu0 %v763
      %v972 = vpop.f32.mrb[0].mxu0
      %v973 = vadd.f32 %v688, %v972
      %v974 = vpop.f32.mrb[0].mxu0
      %975 = vmatprep.mubr.f32.mxu0 0.0
      %976 = vmatmul.mubr.f32.gmra.mrb[0].mxu0 %v766
      %v977 = vpop.f32.mrb[0].mxu0
      %v978 = vadd.f32 %v688, %v977
      %v979 = vpop.f32.mrb[0].mxu0
      %980 = vmatprep.mubr.f32.mxu0 0.0
      %981 = vmatmul.mubr.f32.gmra.mrb[0].mxu0 %v769
      %v982 = vpop.f32.mrb[0].mxu0
      %v983 = vadd.f32 %v688, %v982
      %v984 = vpop.f32.mrb[0].mxu0
      %985 = vmatprep.mubr.f32.mxu0 0.0
      %986 = vmatmul.mubr.f32.gmra.mrb[0].mxu0 %v772
      %v987 = vpop.f32.mrb[0].mxu0
      %v988 = vadd.f32 %v688, %v987
      %v989 = vpop.f32.mrb[0].mxu0
      %990 = vmatprep.mubr.f32.mxu0 0.0
      %991 = vmatmul.mubr.f32.gmra.mrb[0].mxu0 %v775
      %v992 = vpop.f32.mrb[0].mxu0
      %v993 = vadd.f32 %v688, %v992
      %v994 = vpop.f32.mrb[0].mxu0
      %995 = vmatprep.mubr.f32.mxu0 0.0
      %996 = vmatmul.mubr.f32.gmra.mrb[0].mxu0 %v778
      %v997 = vpop.f32.mrb[0].mxu0
      %v998 = vadd.f32 %v688, %v997
      %v999 = vpop.f32.mrb[0].mxu0
      %1000 = vmatprep.mubr.f32.mxu0 0.0
      %1001 = vmatmul.mubr.f32.gmra.mrb[0].mxu0 %v781
      %v1002 = vpop.f32.mrb[0].mxu0
      %v1003 = vadd.f32 %v688, %v1002
      %v1004 = vpop.f32.mrb[0].mxu0
      %1005 = vmatprep.mubr.f32.mxu0 0.0
      %1006 = vmatmul.mubr.f32.gmra.mrb[0].mxu0 %v784
      %v1007 = vpop.f32.mrb[0].mxu0
      %v1008 = vadd.f32 %v688, %v1007
      %v1009 = vpop.f32.mrb[0].mxu0
      %1010 = vdwg.mxu0
      %v1011 = vmax.f32 %v853, 0.0
      %v1012 = vmax.f32 %v858, 0.0
      %v1013 = vmax.f32 %v863, 0.0
      %v1014 = vmax.f32 %v868, 0.0
      %v1015 = vmax.f32 %v873, 0.0
      %v1016 = vmax.f32 %v878, 0.0
      %v1017 = vmax.f32 %v883, 0.0
      %v1018 = vmax.f32 %v888, 0.0
      %v1019 = vmax.f32 %v893, 0.0
      %v1020 = vmax.f32 %v898, 0.0
      %v1021 = vmax.f32 %v903, 0.0
      %v1022 = vmax.f32 %v908, 0.0
      %v1023 = vmax.f32 %v913, 0.0
      %v1024 = vmax.f32 %v918, 0.0
      %v1025 = vmax.f32 %v923, 0.0
      %v1026 = vmax.f32 %v928, 0.0
      %v1027 = vmax.f32 %v933, 0.0
      %v1028 = vmax.f32 %v938, 0.0
      %v1029 = vmax.f32 %v943, 0.0
      %v1030 = vmax.f32 %v948, 0.0
      %v1031 = vmax.f32 %v953, 0.0
      %v1032 = vmax.f32 %v958, 0.0
      %v1033 = vmax.f32 %v963, 0.0
      %v1034 = vmax.f32 %v968, 0.0
      %v1035 = vmax.f32 %v973, 0.0
      %v1036 = vmax.f32 %v978, 0.0
      %v1037 = vmax.f32 %v983, 0.0
      %v1038 = vmax.f32 %v988, 0.0
      %v1039 = vmax.f32 %v993, 0.0
      %v1040 = vmax.f32 %v998, 0.0
      %v1041 = vmax.f32 %v1003, 0.0
      %v1042 = vmax.f32 %v1008, 0.0
      %v1043 = vld [vmem:[%s5] sm:$0xff]
      %v1044 = vld [vmem:[%s5 + $0x8] sm:$0xff]
      %v1045 = vld [vmem:[%s6] sm:$0x1]
      %v1047 = vlaneseq
      %v1048 = vshrl.u32 %v1047, 7
      %v1049 = vsub.s32 0, %v1048
      %v1050 = vrot.slane %v1045, %v1049
      %vm1052 = vcmask 130048
      %v1054 = vsel %vm1052, %v1011, 0
      %v1057 = vsel %vm1052, %v1012, 0
      %v1060 = vsel %vm1052, %v1013, 0
      %v1063 = vsel %vm1052, %v1014, 0
      %v1066 = vsel %vm1052, %v1015, 0
      %v1069 = vsel %vm1052, %v1016, 0
      %v1072 = vsel %vm1052, %v1017, 0
      %v1075 = vsel %vm1052, %v1018, 0
      %v1078 = vsel %vm1052, %v1019, 0
      %v1081 = vsel %vm1052, %v1020, 0
      %v1084 = vsel %vm1052, %v1021, 0
      %v1087 = vsel %vm1052, %v1022, 0
      %v1090 = vsel %vm1052, %v1023, 0
      %v1093 = vsel %vm1052, %v1024, 0
      %v1096 = vsel %vm1052, %v1025, 0
      %v1099 = vsel %vm1052, %v1026, 0
      %v1102 = vsel %vm1052, %v1027, 0
      %v1105 = vsel %vm1052, %v1028, 0
      %v1108 = vsel %vm1052, %v1029, 0
      %v1111 = vsel %vm1052, %v1030, 0
      %v1114 = vsel %vm1052, %v1031, 0
      %v1117 = vsel %vm1052, %v1032, 0
      %v1120 = vsel %vm1052, %v1033, 0
      %v1123 = vsel %vm1052, %v1034, 0
      %v1126 = vsel %vm1052, %v1035, 0
      %v1129 = vsel %vm1052, %v1036, 0
      %v1132 = vsel %vm1052, %v1037, 0
      %v1135 = vsel %vm1052, %v1038, 0
      %v1138 = vsel %vm1052, %v1039, 0
      %v1141 = vsel %vm1052, %v1040, 0
      %v1144 = vsel %vm1052, %v1041, 0
      %v1147 = vsel %vm1052, %v1042, 0
      %1149 = vmatprep.subr.mxu0 0.0
      %1150 = vmatpush1.msra.mxu0 %v1043
      %1151 = vmatprep.subr.mxu0 0.0
      %1152 = vmatpush1.msra.mxu0 %v1044
      %1153 = vmatprep.subr.mxu0 0.0
      %1154 = vmatpush1.msra.mxu0 0.0
      %1155 = vmatprep.subr.mxu0 0.0
      %1156 = vmatpush1.msra.mxu0 0.0
      %1157 = vmatprep.subr.mxu0 0.0
      %1158 = vmatpush1.msra.mxu0 0.0
      %1159 = vmatprep.subr.mxu0 0.0
      %1160 = vmatpush1.msra.mxu0 0.0
      %1161 = vmatprep.subr.mxu0 0.0
      %1162 = vmatpush1.msra.mxu0 0.0
      %1163 = vmatprep.subr.mxu0 0.0
      %1164 = vmatpush1.msra.mxu0 0.0
      %1165 = vmatprep.subr.mxu0 0.0
      %1166 = vmatpush1.msra.mxu0 0.0
      %1167 = vmatprep.subr.mxu0 0.0
      %1168 = vmatpush1.msra.mxu0 0.0
      %1169 = vmatprep.subr.mxu0 0.0
      %1170 = vmatpush1.msra.mxu0 0.0
      %1171 = vmatprep.subr.mxu0 0.0
      %1172 = vmatpush1.msra.mxu0 0.0
      %1173 = vmatprep.subr.mxu0 0.0
      %1174 = vmatpush1.msra.mxu0 0.0
      %1175 = vmatprep.subr.mxu0 0.0
      %1176 = vmatpush1.msra.mxu0 0.0
      %1177 = vmatprep.subr.mxu0 0.0
      %1178 = vmatpush1.msra.mxu0 0.0
      %1179 = vmatprep.subr.mxu0 0.0
      %1180 = vmatpush1.msra.mxu0 0.0
      %1181 = vmatprep.subr.mxu0 0.0
      %1182 = vmatpush1.msra.mxu0 0.0
      %1183 = vmatprep.subr.mxu0 0.0
      %1184 = vmatpush1.msra.mxu0 0.0
      %1185 = vmatprep.subr.mxu0 0.0
      %1186 = vmatpush1.msra.mxu0 0.0
      %1187 = vmatprep.subr.mxu0 0.0
      %1188 = vmatpush1.msra.mxu0 0.0
      %1189 = vmatprep.subr.mxu0 0.0
      %1190 = vmatpush1.msra.mxu0 0.0
      %1191 = vmatprep.subr.mxu0 0.0
      %1192 = vmatpush1.msra.mxu0 0.0
      %1193 = vmatprep.subr.mxu0 0.0
      %1194 = vmatpush1.msra.mxu0 0.0
      %1195 = vmatprep.subr.mxu0 0.0
      %1196 = vmatpush1.msra.mxu0 0.0
      %1197 = vmatprep.subr.mxu0 0.0
      %1198 = vmatpush1.msra.mxu0 0.0
      %1199 = vmatprep.subr.mxu0 0.0
      %1200 = vmatpush1.msra.mxu0 0.0
      %1201 = vmatprep.subr.mxu0 0.0
      %1202 = vmatpush1.msra.mxu0 0.0
      %1203 = vmatprep.subr.mxu0 0.0
      %1204 = vmatpush1.msra.mxu0 0.0
      %1205 = vmatprep.subr.mxu0 0.0
      %1206 = vmatpush1.msra.mxu0 0.0
      %1207 = vmatprep.subr.mxu0 0.0
      %1208 = vmatpush1.msra.mxu0 0.0
      %1209 = vmatprep.subr.mxu0 0.0
      %1210 = vmatpush1.msra.mxu0 0.0
      %1211 = vmatprep.subr.mxu0 0.0
      %1212 = vmatpush1.msra.mxu0 0.0
      %1213 = vmatprep.mubr.f32.mxu0 0.0
      %1214 = vmatmul.mubr.f32.gmra.mrb[0].mxu0 %v1054
      %v1215 = vpop.f32.mrb[0].mxu0
      %v1216 = vadd.f32 %v1050, %v1215
      %v1217 = vpop.f32.mrb[0].mxu0
      %1218 = vmatprep.mubr.f32.mxu0 0.0
      %1219 = vmatmul.mubr.f32.gmra.mrb[0].mxu0 %v1057
      %v1220 = vpop.f32.mrb[0].mxu0
      %v1221 = vadd.f32 %v1050, %v1220
      %v1222 = vpop.f32.mrb[0].mxu0
      %1223 = vmatprep.mubr.f32.mxu0 0.0
      %1224 = vmatmul.mubr.f32.gmra.mrb[0].mxu0 %v1060
      %v1225 = vpop.f32.mrb[0].mxu0
      %v1226 = vadd.f32 %v1050, %v1225
      %v1227 = vpop.f32.mrb[0].mxu0
      %1228 = vmatprep.mubr.f32.mxu0 0.0
      %1229 = vmatmul.mubr.f32.gmra.mrb[0].mxu0 %v1063
      %v1230 = vpop.f32.mrb[0].mxu0
      %v1231 = vadd.f32 %v1050, %v1230
      %v1232 = vpop.f32.mrb[0].mxu0
      %1233 = vmatprep.mubr.f32.mxu0 0.0
      %1234 = vmatmul.mubr.f32.gmra.mrb[0].mxu0 %v1066
      %v1235 = vpop.f32.mrb[0].mxu0
      %v1236 = vadd.f32 %v1050, %v1235
      %v1237 = vpop.f32.mrb[0].mxu0
      %1238 = vmatprep.mubr.f32.mxu0 0.0
      %1239 = vmatmul.mubr.f32.gmra.mrb[0].mxu0 %v1069
      %v1240 = vpop.f32.mrb[0].mxu0
      %v1241 = vadd.f32 %v1050, %v1240
      %v1242 = vpop.f32.mrb[0].mxu0
      %1243 = vmatprep.mubr.f32.mxu0 0.0
      %1244 = vmatmul.mubr.f32.gmra.mrb[0].mxu0 %v1072
      %v1245 = vpop.f32.mrb[0].mxu0
      %v1246 = vadd.f32 %v1050, %v1245
      %v1247 = vpop.f32.mrb[0].mxu0
      %1248 = vmatprep.mubr.f32.mxu0 0.0
      %1249 = vmatmul.mubr.f32.gmra.mrb[0].mxu0 %v1075
      %v1250 = vpop.f32.mrb[0].mxu0
      %v1251 = vadd.f32 %v1050, %v1250
      %v1252 = vpop.f32.mrb[0].mxu0
      %1253 = vmatprep.mubr.f32.mxu0 0.0
      %1254 = vmatmul.mubr.f32.gmra.mrb[0].mxu0 %v1078
      %v1255 = vpop.f32.mrb[0].mxu0
      %v1256 = vadd.f32 %v1050, %v1255
      %v1257 = vpop.f32.mrb[0].mxu0
      %1258 = vmatprep.mubr.f32.mxu0 0.0
      %1259 = vmatmul.mubr.f32.gmra.mrb[0].mxu0 %v1081
      %v1260 = vpop.f32.mrb[0].mxu0
      %v1261 = vadd.f32 %v1050, %v1260
      %v1262 = vpop.f32.mrb[0].mxu0
      %1263 = vmatprep.mubr.f32.mxu0 0.0
      %1264 = vmatmul.mubr.f32.gmra.mrb[0].mxu0 %v1084
      %v1265 = vpop.f32.mrb[0].mxu0
      %v1266 = vadd.f32 %v1050, %v1265
      %v1267 = vpop.f32.mrb[0].mxu0
      %1268 = vmatprep.mubr.f32.mxu0 0.0
      %1269 = vmatmul.mubr.f32.gmra.mrb[0].mxu0 %v1087
      %v1270 = vpop.f32.mrb[0].mxu0
      %v1271 = vadd.f32 %v1050, %v1270
      %v1272 = vpop.f32.mrb[0].mxu0
      %1273 = vmatprep.mubr.f32.mxu0 0.0
      %1274 = vmatmul.mubr.f32.gmra.mrb[0].mxu0 %v1090
      %v1275 = vpop.f32.mrb[0].mxu0
      %v1276 = vadd.f32 %v1050, %v1275
      %v1277 = vpop.f32.mrb[0].mxu0
      %1278 = vmatprep.mubr.f32.mxu0 0.0
      %1279 = vmatmul.mubr.f32.gmra.mrb[0].mxu0 %v1093
      %v1280 = vpop.f32.mrb[0].mxu0
      %v1281 = vadd.f32 %v1050, %v1280
      %v1282 = vpop.f32.mrb[0].mxu0
      %1283 = vmatprep.mubr.f32.mxu0 0.0
      %1284 = vmatmul.mubr.f32.gmra.mrb[0].mxu0 %v1096
      %v1285 = vpop.f32.mrb[0].mxu0
      %v1286 = vadd.f32 %v1050, %v1285
      %v1287 = vpop.f32.mrb[0].mxu0
      %1288 = vmatprep.mubr.f32.mxu0 0.0
      %1289 = vmatmul.mubr.f32.gmra.mrb[0].mxu0 %v1099
      %v1290 = vpop.f32.mrb[0].mxu0
      %v1291 = vadd.f32 %v1050, %v1290
      %v1292 = vpop.f32.mrb[0].mxu0
      %1293 = vmatprep.mubr.f32.mxu0 0.0
      %1294 = vmatmul.mubr.f32.gmra.mrb[0].mxu0 %v1102
      %v1295 = vpop.f32.mrb[0].mxu0
      %v1296 = vadd.f32 %v1050, %v1295
      %v1297 = vpop.f32.mrb[0].mxu0
      %1298 = vmatprep.mubr.f32.mxu0 0.0
      %1299 = vmatmul.mubr.f32.gmra.mrb[0].mxu0 %v1105
      %v1300 = vpop.f32.mrb[0].mxu0
      %v1301 = vadd.f32 %v1050, %v1300
      %v1302 = vpop.f32.mrb[0].mxu0
      %1303 = vmatprep.mubr.f32.mxu0 0.0
      %1304 = vmatmul.mubr.f32.gmra.mrb[0].mxu0 %v1108
      %v1305 = vpop.f32.mrb[0].mxu0
      %v1306 = vadd.f32 %v1050, %v1305
      %v1307 = vpop.f32.mrb[0].mxu0
      %1308 = vmatprep.mubr.f32.mxu0 0.0
      %1309 = vmatmul.mubr.f32.gmra.mrb[0].mxu0 %v1111
      %v1310 = vpop.f32.mrb[0].mxu0
      %v1311 = vadd.f32 %v1050, %v1310
      %v1312 = vpop.f32.mrb[0].mxu0
      %1313 = vmatprep.mubr.f32.mxu0 0.0
      %1314 = vmatmul.mubr.f32.gmra.mrb[0].mxu0 %v1114
      %v1315 = vpop.f32.mrb[0].mxu0
      %v1316 = vadd.f32 %v1050, %v1315
      %v1317 = vpop.f32.mrb[0].mxu0
      %1318 = vmatprep.mubr.f32.mxu0 0.0
      %1319 = vmatmul.mubr.f32.gmra.mrb[0].mxu0 %v1117
      %v1320 = vpop.f32.mrb[0].mxu0
      %v1321 = vadd.f32 %v1050, %v1320
      %v1322 = vpop.f32.mrb[0].mxu0
      %1323 = vmatprep.mubr.f32.mxu0 0.0
      %1324 = vmatmul.mubr.f32.gmra.mrb[0].mxu0 %v1120
      %v1325 = vpop.f32.mrb[0].mxu0
      %v1326 = vadd.f32 %v1050, %v1325
      %v1327 = vpop.f32.mrb[0].mxu0
      %1328 = vmatprep.mubr.f32.mxu0 0.0
      %1329 = vmatmul.mubr.f32.gmra.mrb[0].mxu0 %v1123
      %v1330 = vpop.f32.mrb[0].mxu0
      %v1331 = vadd.f32 %v1050, %v1330
      %v1332 = vpop.f32.mrb[0].mxu0
      %1333 = vmatprep.mubr.f32.mxu0 0.0
      %1334 = vmatmul.mubr.f32.gmra.mrb[0].mxu0 %v1126
      %v1335 = vpop.f32.mrb[0].mxu0
      %v1336 = vadd.f32 %v1050, %v1335
      %v1337 = vpop.f32.mrb[0].mxu0
      %1338 = vmatprep.mubr.f32.mxu0 0.0
      %1339 = vmatmul.mubr.f32.gmra.mrb[0].mxu0 %v1129
      %v1340 = vpop.f32.mrb[0].mxu0
      %v1341 = vadd.f32 %v1050, %v1340
      %v1342 = vpop.f32.mrb[0].mxu0
      %1343 = vmatprep.mubr.f32.mxu0 0.0
      %1344 = vmatmul.mubr.f32.gmra.mrb[0].mxu0 %v1132
      %v1345 = vpop.f32.mrb[0].mxu0
      %v1346 = vadd.f32 %v1050, %v1345
      %v1347 = vpop.f32.mrb[0].mxu0
      %1348 = vmatprep.mubr.f32.mxu0 0.0
      %1349 = vmatmul.mubr.f32.gmra.mrb[0].mxu0 %v1135
      %v1350 = vpop.f32.mrb[0].mxu0
      %v1351 = vadd.f32 %v1050, %v1350
      %v1352 = vpop.f32.mrb[0].mxu0
      %1353 = vmatprep.mubr.f32.mxu0 0.0
      %1354 = vmatmul.mubr.f32.gmra.mrb[0].mxu0 %v1138
      %v1355 = vpop.f32.mrb[0].mxu0
      %v1356 = vadd.f32 %v1050, %v1355
      %v1357 = vpop.f32.mrb[0].mxu0
      %1358 = vmatprep.mubr.f32.mxu0 0.0
      %1359 = vmatmul.mubr.f32.gmra.mrb[0].mxu0 %v1141
      %v1360 = vpop.f32.mrb[0].mxu0
      %v1361 = vadd.f32 %v1050, %v1360
      %v1362 = vpop.f32.mrb[0].mxu0
      %1363 = vmatprep.mubr.f32.mxu0 0.0
      %1364 = vmatmul.mubr.f32.gmra.mrb[0].mxu0 %v1144
      %v1365 = vpop.f32.mrb[0].mxu0
      %v1366 = vadd.f32 %v1050, %v1365
      %v1367 = vpop.f32.mrb[0].mxu0
      %1368 = vmatprep.mubr.f32.mxu0 0.0
      %1369 = vmatmul.mubr.f32.gmra.mrb[0].mxu0 %v1147
      %v1370 = vpop.f32.mrb[0].mxu0
      %v1371 = vadd.f32 %v1050, %v1370
      %v1372 = vpop.f32.mrb[0].mxu0
      %1373 = vdwg.mxu0
      %vm1374 = vcmask 97280
      %1375 = vst.msk [vmem:[%s280] sm:$0xff] %vm1374, %v1216
      %1376 = vst.msk [vmem:[%s280 + $0x8] sm:$0xff] %vm1374, %v1221
      %1377 = vst.msk [vmem:[%s280 + $0x10] sm:$0xff] %vm1374, %v1226
      %1378 = vst.msk [vmem:[%s280 + $0x18] sm:$0xff] %vm1374, %v1231
      %1379 = vst.msk [vmem:[%s280 + $0x20] sm:$0xff] %vm1374, %v1236
      %1380 = vst.msk [vmem:[%s280 + $0x28] sm:$0xff] %vm1374, %v1241
      %1381 = vst.msk [vmem:[%s280 + $0x30] sm:$0xff] %vm1374, %v1246
      %1382 = vst.msk [vmem:[%s280 + $0x38] sm:$0xff] %vm1374, %v1251
      %1383 = vst.msk [vmem:[%s280 + $0x40] sm:$0xff] %vm1374, %v1256
      %1384 = vst.msk [vmem:[%s280 + $0x48] sm:$0xff] %vm1374, %v1261
      %1385 = vst.msk [vmem:[%s280 + $0x50] sm:$0xff] %vm1374, %v1266
      %1386 = vst.msk [vmem:[%s280 + $0x58] sm:$0xff] %vm1374, %v1271
      %1387 = vst.msk [vmem:[%s280 + $0x60] sm:$0xff] %vm1374, %v1276
      %1388 = vst.msk [vmem:[%s280 + $0x68] sm:$0xff] %vm1374, %v1281
      %1389 = vst.msk [vmem:[%s280 + $0x70] sm:$0xff] %vm1374, %v1286
      %1390 = vst.msk [vmem:[%s280 + $0x78] sm:$0xff] %vm1374, %v1291
      %1391 = vst.msk [vmem:[%s280 + $0x80] sm:$0xff] %vm1374, %v1296
      %1392 = vst.msk [vmem:[%s280 + $0x88] sm:$0xff] %vm1374, %v1301
      %1393 = vst.msk [vmem:[%s280 + $0x90] sm:$0xff] %vm1374, %v1306
      %1394 = vst.msk [vmem:[%s280 + $0x98] sm:$0xff] %vm1374, %v1311
      %1395 = vst.msk [vmem:[%s280 + $0xa0] sm:$0xff] %vm1374, %v1316
      %1396 = vst.msk [vmem:[%s280 + $0xa8] sm:$0xff] %vm1374, %v1321
      %1397 = vst.msk [vmem:[%s280 + $0xb0] sm:$0xff] %vm1374, %v1326
      %1398 = vst.msk [vmem:[%s280 + $0xb8] sm:$0xff] %vm1374, %v1331
      %1399 = vst.msk [vmem:[%s280 + $0xc0] sm:$0xff] %vm1374, %v1336
      %1400 = vst.msk [vmem:[%s280 + $0xc8] sm:$0xff] %vm1374, %v1341
      %1401 = vst.msk [vmem:[%s280 + $0xd0] sm:$0xff] %vm1374, %v1346
      %1402 = vst.msk [vmem:[%s280 + $0xd8] sm:$0xff] %vm1374, %v1351
      %1403 = vst.msk [vmem:[%s280 + $0xe0] sm:$0xff] %vm1374, %v1356
      %1404 = vst.msk [vmem:[%s280 + $0xe8] sm:$0xff] %vm1374, %v1361
      %1405 = vst.msk [vmem:[%s280 + $0xf0] sm:$0xff] %vm1374, %v1366
      %1406 = vst.msk [vmem:[%s280 + $0xf8] sm:$0xff] %vm1374, %v1371
      %s1407 = smul.u32 32, %s18
      %p1408 = scmp.lt.s32.totalorder %s1407, 63
      %s1409 = scalar_select %p1408, %s1407, 63
      %s1410 = smul.addr %s1409, 8
      %s1411 = scalar_lea.vmem %s7, %s1410
      // Predicated region
      $region49: #{mlp_forward.1} parent=47 // pred_check
        %p1412 = pneg %p188
      $region50: #{mlp_forward.1} parent=47 // pred_check_branch
        %1414 = sbr.rel (%p1412) target = $region52
      $region51: #{mlp_forward.1} parent=47 // pred_region
        %s1415 = smul.u32 32, %s18
      $region52: #{mlp_forward.1} parent=47 // pred_fallthru
        _
    $region48: #{mlp_forward.1} parent=5 // pred_fallthru
      _
    %p1416 = scmp.le.s32.totalorder 2, %s13
    // Predicated region
    $region53: #{mlp_forward.1} parent=5 // pred_check
      %p1417 = pneg %p1416
    $region54: #{mlp_forward.1} parent=5 // pred_check_branch
      %1419 = sbr.rel (%p1417) target = $region56
    $region55: #{mlp_forward.1} parent=5 // pred_region
      %s1420 = ssub.s32 %s13, 2
      // Predicated region
      $region57: #{mlp_forward.1} parent=55 // pred_check
        %p1421 = pneg %p194
      $region58: #{mlp_forward.1} parent=55 // pred_check_branch
        %1423 = sbr.rel (%p1421) target = $region60
      $region59: #{mlp_forward.1} parent=55 // pred_region
        %s1424 = smul.u32 32, %s19
        %p1425 = scmp.lt.s32.totalorder %s1424, 63
        %s1426 = scalar_select %p1425, %s1424, 63
        %s1427 = smul.addr %s1426, 8
        %s1428 = scalar_lea.vmem %s7, %s1427
      $region60: #{mlp_forward.1} parent=55 // pred_fallthru
        _
    $region56: #{mlp_forward.1} parent=5 // pred_fallthru
      _
  $region6: #{mlp_forward.1} parent=0 // loop_footer
    %s17 = sadd.s32 1, %s13
  $region7: #{mlp_forward.1} parent=0 // loop_footer_branch
    %12 = sbr.rel target = $region3
  $region8: #{mlp_forward.1} parent=0 // loop_exit
    _

</llo_original>
